<compile_context>
chip_gen: v6e
topology: v6e:2x2x1
jax: 0.10.0
libtpu: 0.0.40
codegen_flags: <defaults>
</compile_context>

<pallas_src>
import math

import jax
import jax.numpy as jnp
from jax import lax
from jax.experimental import pallas as pl
from jax.experimental.pallas import tpu as pltpu


def _layer_norm_fused(x, gamma, beta, eps=1e-5):
    """LayerNorm over the lane axis, E[x^2]-mean^2 form (kernel-side)."""
    mu = jnp.mean(x, axis=-1, keepdims=True)
    msq = jnp.mean(x * x, axis=-1, keepdims=True)
    var = msq - mu * mu
    return (x - mu) * lax.rsqrt(var + eps) * gamma + beta


def _layer_norm_ref(x, gamma, beta, eps=1e-5):
    """Textbook LayerNorm for the pure-JAX reference (independent check)."""
    mu = jnp.mean(x, axis=-1, keepdims=True)
    var = jnp.mean(jnp.square(x - mu), axis=-1, keepdims=True)
    return (x - mu) * lax.rsqrt(var + eps) * gamma + beta


def encoder_block_kernel(x_ref, pe_ref, small_ref, w_dw_ref, w_pw_ref,
                         w_qkv_ref, b_qkv_ref, w_map_ref, w_ff_ref, o_ref):
    """Process Bt batch elements (Bt, S, H) fully in VMEM.

    x_ref     : (Bt, S, H)      input slab for this grid step
    pe_ref    : (S, H)          positional encoding (resident)
    small_ref : (4*C + 6, H)    packed LN gamma/beta + biases, rows:
                                [0:2C)  conv LN (gamma_i, beta_i interleaved)
                                [2C:3C) depthwise bias_i
                                [3C:4C) pointwise bias_i
                                4C,4C+1 attn LN gamma/beta; 4C+2 map bias
                                4C+3,4C+4 ff LN gamma/beta;  4C+5 ff bias
    w_dw_ref  : (C, k, H)       depthwise taps (tap-major, channel on lanes)
    w_pw_ref  : (C, H, H)       pointwise (1x1) conv weight, (in, out)
    w_qkv_ref : (H, 3*Dp)       fused Q/K/V weight, Q columns pre-scaled by
                                1/sqrt(d_k), (in, out)
    b_qkv_ref : (1, 3*Dp)       fused Q/K/V bias (Q part pre-scaled)
    w_map_ref : (Dp, H)         attention output projection, (in, out)
    w_ff_ref  : (H, H)          feedforward weight, (in, out)
    o_ref     : (Bt, S, H)
    """
    Bt, S, H = x_ref.shape
    R = Bt * S
    C = w_pw_ref.shape[0]
    ksize = w_dw_ref.shape[1]
    pad = ksize // 2
    Dp = w_map_ref.shape[0]
    cdt = w_ff_ref.dtype          # MXU operand dtype (f32 or bf16)

    small = small_ref[...]        # (4*C + 6, H), f32

    # ---- positional encoding, then flatten batch*seq onto the sublane axis ----
    x = (x_ref[...].astype(jnp.float32) + pe_ref[...]).reshape(R, H)

    # Per-tap validity masks for the depthwise conv on the flattened view
    # (rows from neighbouring batch elements must not leak across the rolls).
    pos = lax.broadcasted_iota(jnp.int32, (Bt, S, 1), 1).reshape(R, 1)
    tap_masks = []
    for t in range(ksize):
        d = t - pad
        tap_masks.append(None if d == 0
                         else jnp.logical_and(pos + d >= 0, pos + d < S))

    # ---- depthwise-separable conv stack (C is small -> static unroll) ----
    for i in range(C):
        residual = x
        xn = _layer_norm_fused(x, small[2 * i:2 * i + 1, :],
                               small[2 * i + 1:2 * i + 2, :])
        # Depthwise conv along the sequence axis: per-tap sublane rotation
        # (XLU slot) + edge mask, instead of zero-pad concat + unaligned slices.
        w_dw = w_dw_ref[i]                                    # (k, H)
        acc = jnp.zeros((R, H), jnp.float32)
        for t in range(ksize):
            d = t - pad
            if d == 0:
                tap = xn
            else:
                shifted = pltpu.roll(xn, shift=(-d) % R, axis=0)
                tap = jnp.where(tap_masks[t], shifted, 0.0)
            acc = acc + w_dw[t:t + 1, :] * tap
        y = acc + small[2 * C + i:2 * C + i + 1, :]           # + depthwise bias
        # Pointwise (1x1) conv == dense over channels -> MXU matmul, M = Bt*S.
        z = jnp.dot(y.astype(cdt), w_pw_ref[i],
                    preferred_element_type=jnp.float32)
        x = z + small[3 * C + i:3 * C + i + 1, :] + residual

    # ---- self-attention (single effective head of width Dp = H * d_k) ----
    residual = x
    xn = _layer_norm_fused(x, small[4 * C:4 * C + 1, :],
                           small[4 * C + 1:4 * C + 2, :])
    # Fused Q/K/V projection; 1/sqrt(d_k) is pre-folded into the Q columns.
    qkv = jnp.dot(xn.astype(cdt), w_qkv_ref[...],
                  preferred_element_type=jnp.float32) + b_qkv_ref[...]
    q = qkv[:, 0:Dp].reshape(Bt, S, Dp)
    k = qkv[:, Dp:2 * Dp].reshape(Bt, S, Dp)
    v = qkv[:, 2 * Dp:3 * Dp].reshape(Bt, S, Dp)

    # Batched q @ k^T (contraction dims, no explicit transpose); softmax per row.
    scores = jnp.einsum("bqd,bkd->bqk", q.astype(cdt), k.astype(cdt),
                        preferred_element_type=jnp.float32)
    m = jnp.max(scores, axis=-1, keepdims=True)
    e = jnp.exp(scores - m)
    # Divide -> EUP approximate reciprocal (free slot alongside VPU work).
    attn = e * pl.reciprocal(jnp.sum(e, axis=-1, keepdims=True), approx=True)

    ctx = jnp.einsum("bqk,bkd->bqd", attn.astype(cdt), v.astype(cdt),
                     preferred_element_type=jnp.float32).reshape(R, Dp)
    att_out = jnp.dot(ctx.astype(cdt), w_map_ref[...],
                      preferred_element_type=jnp.float32) \
        + small[4 * C + 2:4 * C + 3, :]
    x = att_out + residual

    # ---- feedforward ----
    residual = x
    xn = _layer_norm_fused(x, small[4 * C + 3:4 * C + 4, :],
                           small[4 * C + 4:4 * C + 5, :])
    x = jnp.dot(xn.astype(cdt), w_ff_ref[...],
                preferred_element_type=jnp.float32) \
        + small[4 * C + 5:4 * C + 6, :] + residual

    o_ref[...] = x.reshape(Bt, S, H).astype(o_ref.dtype)


def _choose_block_batch(B, S, target_rows=512, min_grid_steps=2):
    """Largest divisor Bt of B with Bt*S <= target_rows; prefer >=2 grid steps
    (megacore / pipelining) when that still leaves an MXU-height tile."""
    bt_max = max(1, target_rows // S)
    divisors = [d for d in range(1, B + 1) if B % d == 0 and d <= bt_max]
    if not divisors:
        divisors = [1]
    best = divisors[-1]
    multi = [d for d in divisors if B // d >= min_grid_steps]
    if multi and multi[-1] * S >= 128:
        best = multi[-1]
    return best


def encoder_block(x, params, n_heads=8, mm_dtype=jnp.float32, target_rows=512):
    """Pallas-backed EncoderBlock forward.  x: (B, S, H), params in torch layout.

    mm_dtype: dtype for MXU operands (weights + casts at dot sites).  Use
    jnp.bfloat16 on v6e/v7x for ~2-3x MXU throughput and half the weight VMEM;
    all VPU/EUP math (LN, softmax, residuals) stays f32 regardless.
    """
    B, S, H = x.shape
    C = len(params["convs"])
    d_k = H // n_heads
    Dp = H * d_k

    Bt = _choose_block_batch(B, S, target_rows=target_rows)
    grid = (B // Bt,)

    # --- one-time layout prep (in a real model, done at parameter init) ---
    pe = params["pe"][:S].astype(jnp.float32)                                 # (S, H)
    w_dw = jnp.stack([c["dw_w"][:, 0, :].T for c in params["convs"]]).astype(jnp.float32)  # (C, k, H)
    w_pw = jnp.stack([c["pw_w"][:, :, 0].T for c in params["convs"]]).astype(mm_dtype)     # (C, H, H)

    scale = 1.0 / math.sqrt(d_k)   # folded into the Q projection columns
    w_qkv = jnp.concatenate([params["wq"].T * scale, params["wk"].T, params["wv"].T],
                            axis=1).astype(mm_dtype)                          # (H, 3*Dp)
    b_qkv = jnp.concatenate([params["bq"] * scale, params["bk"],
                             params["bv"]])[None, :].astype(jnp.float32)      # (1, 3*Dp)
    w_map = params["wm"].T.astype(mm_dtype)                                   # (Dp, H)
    w_ff = params["wff"].T.astype(mm_dtype)                                   # (H, H)

    # Pack every width-H LN/bias vector into one array -> one resident DMA.
    rows = []
    for (g, b) in params["ln_convs"]:
        rows += [g, b]
    rows += [c["dw_b"] for c in params["convs"]]
    rows += [c["pw_b"] for c in params["convs"]]
    rows += [params["ln_attn"][0], params["ln_attn"][1], params["bm"],
             params["ln_ff"][0], params["ln_ff"][1], params["bff"]]
    small = jnp.stack(rows).astype(jnp.float32)                               # (4*C + 6, H)

    ksize = w_dw.shape[1]

    row_map = lambda b: (b, 0, 0)
    const2 = lambda b: (0, 0)
    const3 = lambda b: (0, 0, 0)

    # Rough VMEM budget (double-buffered x/out slabs + resident weights +
    # in-kernel temporaries); give v7x (64 MiB physical) an explicit limit.
    f32 = 4
    act_bytes = Bt * S * (8 * H + 4 * 3 * Dp + 4 * S) * f32
    wt_bytes = (pe.size + small.size + w_dw.size + b_qkv.size) * f32 + \
        (w_pw.size + w_qkv.size + w_map.size + w_ff.size) * jnp.dtype(mm_dtype).itemsize
    vmem_limit = int(min(64 * 2**20, max(32 * 2**20, 3 * (act_bytes + 2 * wt_bytes))))

    out = pl.pallas_call(
        encoder_block_kernel,
        out_shape=jax.ShapeDtypeStruct((B, S, H), x.dtype),
        grid_spec=pltpu.PrefetchScalarGridSpec(
            num_scalar_prefetch=0,
            grid=grid,
            in_specs=[
                pl.BlockSpec((Bt, S, H), row_map),         # x: Bt-batch slab per step
                pl.BlockSpec((S, H), const2),              # positional encoding
                pl.BlockSpec((4 * C + 6, H), const2),      # packed LN params + biases
                pl.BlockSpec((C, ksize, H), const3),       # depthwise weights
                pl.BlockSpec((C, H, H), const3),           # pointwise weights
                pl.BlockSpec((H, 3 * Dp), const2),         # fused Q/K/V weight
                pl.BlockSpec((1, 3 * Dp), const2),         # fused Q/K/V bias
                pl.BlockSpec((Dp, H), const2),             # attention output projection
                pl.BlockSpec((H, H), const2),              # feedforward weight
            ],
            out_specs=pl.BlockSpec((Bt, S, H), row_map),
        ),
        compiler_params=pltpu.CompilerParams(
            dimension_semantics=("parallel",),
            vmem_limit_bytes=vmem_limit),
    )(x, pe, small, w_dw, w_pw, w_qkv, b_qkv, w_map, w_ff)
    return out


def make_positional_encoding(length, d_model):
    """Matches PositionalEncoding.__init__ in the PyTorch spec (even d_model)."""
    pos = jnp.arange(length, dtype=jnp.float32)[:, None]          # (length, 1)
    j = jnp.arange(d_model)
    i_2 = (2 * (j // 2)).astype(jnp.float32)                      # [0,0,2,2,...]
    angle = pos / jnp.power(10000.0, i_2 / d_model)               # (length, d_model)
    return jnp.where(j % 2 == 0, jnp.sin(angle), jnp.cos(angle)).astype(jnp.float32)


def encoder_block_reference(x, params, n_heads=8):
    """Pure-JAX reference with the exact semantics of the PyTorch EncoderBlock."""
    B, S, H = x.shape
    d_k = H // n_heads
    x = x + params["pe"][:S]
    for i, conv in enumerate(params["convs"]):
        g, b = params["ln_convs"][i]
        residual = x
        xn = _layer_norm_ref(x, g, b)
        xc = jnp.transpose(xn, (0, 2, 1))                         # (B, H, S)
        k = conv["dw_w"].shape[-1]
        y = lax.conv_general_dilated(
            xc, conv["dw_w"], window_strides=(1,), padding=[(k // 2, k // 2)],
            dimension_numbers=("NCH", "OIH", "NCH"), feature_group_count=H)
        y = y + conv["dw_b"][None, :, None]
        y = jnp.transpose(y, (0, 2, 1))                           # (B, S, H)
        z = y @ conv["pw_w"][:, :, 0].T + conv["pw_b"]
        x = z + residual
    residual = x
    g, b = params["ln_attn"]
    xn = _layer_norm_ref(x, g, b)
    q = xn @ params["wq"].T + params["bq"]
    kk = xn @ params["wk"].T + params["bk"]
    v = xn @ params["wv"].T + params["bv"]
    scores = jnp.einsum("bsd,btd->bst", q, kk) / math.sqrt(d_k)
    attn = jax.nn.softmax(scores, axis=2)
    ctx = jnp.einsum("bst,btd->bsd", attn, v)
    x = ctx @ params["wm"].T + params["bm"] + residual
    residual = x
    g, b = params["ln_ff"]
    xn = _layer_norm_ref(x, g, b)
    x = xn @ params["wff"].T + params["bff"] + residual
    return x


if __name__ == "__main__":
    key = jax.random.PRNGKey(0)
    batch, seq, hidden = 2, 8, 32
    ksize, num_convs, n_heads = 5, 2, 8
    d_k = hidden // n_heads
    proj = hidden * d_k

    keys = iter(jax.random.split(key, 64))

    def uni(shape, scale):
        return jax.random.uniform(next(keys), shape, minval=-scale, maxval=scale,
                                  dtype=jnp.float32)

    def ln_params():
        g = 1.0 + 0.1 * jax.random.normal(next(keys), (hidden,), dtype=jnp.float32)
        b = 0.1 * jax.random.normal(next(keys), (hidden,), dtype=jnp.float32)
        return (g, b)

    x = jax.random.normal(next(keys), (batch, seq, hidden), dtype=jnp.float32)

    s_dw = 1.0 / math.sqrt(ksize)       # depthwise: fan_in = 1 * k
    s_h = 1.0 / math.sqrt(hidden)       # linears / pointwise: fan_in = hidden
    s_p = 1.0 / math.sqrt(proj)         # projection_map: fan_in = hidden * d_k

    params = {
        "pe": make_positional_encoding(seq, hidden),
        "convs": [],
        "ln_convs": [],
    }
    for _ in range(num_convs):
        params["convs"].append({
            "dw_w": uni((hidden, 1, ksize), s_dw),
            "dw_b": uni((hidden,), s_dw),
            "pw_w": uni((hidden, hidden, 1), s_h),
            "pw_b": uni((hidden,), s_h),
        })
        params["ln_convs"].append(ln_params())
    params["ln_attn"] = ln_params()
    params["ln_ff"] = ln_params()
    params["wq"] = uni((proj, hidden), s_h); params["bq"] = uni((proj,), s_h)
    params["wk"] = uni((proj, hidden), s_h); params["bk"] = uni((proj,), s_h)
    params["wv"] = uni((proj, hidden), s_h); params["bv"] = uni((proj,), s_h)
    params["wm"] = uni((hidden, proj), s_p); params["bm"] = uni((hidden,), s_p)
    params["wff"] = uni((hidden, hidden), s_h); params["bff"] = uni((hidden,), s_h)

    out = encoder_block(x, params, n_heads=n_heads)
    out = jax.block_until_ready(out)

    ref = encoder_block_reference(x, params, n_heads=n_heads)
    assert out.shape == (batch, seq, hidden)
    # Tolerance accounts for the EUP approximate-reciprocal softmax (~2^-12 rel).
    assert jnp.allclose(out, ref, atol=2e-3, rtol=2e-3), "mismatch vs reference"

    print("KERNEL_OK")
</pallas_src>

<mosaic_0001>
module attributes {stable_mosaic.version = 11 : i64} {
  func.func @encoder_block_kernel(%arg0: i32, %arg1: memref<2x8x32xf32, #tpu.memory_space<vmem>>, %arg2: memref<8x32xf32, #tpu.memory_space<vmem>>, %arg3: memref<14x32xf32, #tpu.memory_space<vmem>>, %arg4: memref<2x5x32xf32, #tpu.memory_space<vmem>>, %arg5: memref<2x32x32xf32, #tpu.memory_space<vmem>>, %arg6: memref<32x384xf32, #tpu.memory_space<vmem>>, %arg7: memref<1x384xf32, #tpu.memory_space<vmem>>, %arg8: memref<128x32xf32, #tpu.memory_space<vmem>>, %arg9: memref<32x32xf32, #tpu.memory_space<vmem>>, %arg10: memref<2x8x32xf32, #tpu.memory_space<vmem>>) attributes {dimension_semantics = [#tpu.dimension_semantics<parallel>], iteration_bounds = array<i64: 1>, scalar_prefetch = 0 : i64, scratch_operands = 0 : i64, tpu.core_type = #tpu.core_type<tc>, window_params = [{transform_indices = @transform_0, window_bounds = array<i64: 2, 8, 32>}, {pipeline_mode = #tpu.pipeline_mode<synchronous>, transform_indices = @transform_1, window_bounds = array<i64: 8, 32>}, {pipeline_mode = #tpu.pipeline_mode<synchronous>, transform_indices = @transform_2, window_bounds = array<i64: 14, 32>}, {pipeline_mode = #tpu.pipeline_mode<synchronous>, transform_indices = @transform_3, window_bounds = array<i64: 2, 5, 32>}, {pipeline_mode = #tpu.pipeline_mode<synchronous>, transform_indices = @transform_4, window_bounds = array<i64: 2, 32, 32>}, {pipeline_mode = #tpu.pipeline_mode<synchronous>, transform_indices = @transform_5, window_bounds = array<i64: 32, 384>}, {pipeline_mode = #tpu.pipeline_mode<synchronous>, transform_indices = @transform_6, window_bounds = array<i64: 1, 384>}, {pipeline_mode = #tpu.pipeline_mode<synchronous>, transform_indices = @transform_7, window_bounds = array<i64: 128, 32>}, {pipeline_mode = #tpu.pipeline_mode<synchronous>, transform_indices = @transform_8, window_bounds = array<i64: 32, 32>}, {transform_indices = @transform_9, window_bounds = array<i64: 2, 8, 32>}]} {
    %c0 = arith.constant 0 : index
    %c0_0 = arith.constant 0 : index
    %0 = vector.load %arg3[%c0, %c0_0] : memref<14x32xf32, #tpu.memory_space<vmem>>, vector<14x32xf32>
    %c0_1 = arith.constant 0 : index
    %c0_2 = arith.constant 0 : index
    %c0_3 = arith.constant 0 : index
    %1 = vector.load %arg1[%c0_1, %c0_2, %c0_3] : memref<2x8x32xf32, #tpu.memory_space<vmem>>, vector<2x8x32xf32>
    %c0_4 = arith.constant 0 : index
    %c0_5 = arith.constant 0 : index
    %2 = vector.load %arg2[%c0_4, %c0_5] : memref<8x32xf32, #tpu.memory_space<vmem>>, vector<8x32xf32>
    %3 = vector.shape_cast %2 : vector<8x32xf32> to vector<1x8x32xf32>
    %4 = vector.broadcast %3 : vector<1x8x32xf32> to vector<2x8x32xf32>
    %5 = arith.addf %1, %4 : vector<2x8x32xf32>
    %6 = vector.shape_cast %5 : vector<2x8x32xf32> to vector<16x32xf32>
    %7 = tpu.iota {dimensions = array<i32: 1>} : vector<2x8x1xi32>
    %8 = vector.shape_cast %7 : vector<2x8x1xi32> to vector<16x1xi32>
    %c-2_i32 = arith.constant -2 : i32
    %9 = vector.broadcast %c-2_i32 : i32 to vector<16x1xi32>
    %10 = arith.addi %8, %9 : vector<16x1xi32>
    %c0_i32 = arith.constant 0 : i32
    %11 = vector.broadcast %c0_i32 : i32 to vector<16x1xi32>
    %12 = arith.cmpi sge, %10, %11 : vector<16x1xi32>
    %c-2_i32_6 = arith.constant -2 : i32
    %13 = vector.broadcast %c-2_i32_6 : i32 to vector<16x1xi32>
    %14 = arith.addi %8, %13 : vector<16x1xi32>
    %c8_i32 = arith.constant 8 : i32
    %15 = vector.broadcast %c8_i32 : i32 to vector<16x1xi32>
    %16 = arith.cmpi slt, %14, %15 : vector<16x1xi32>
    %17 = arith.andi %12, %16 : vector<16x1xi1>
    %c-1_i32 = arith.constant -1 : i32
    %18 = vector.broadcast %c-1_i32 : i32 to vector<16x1xi32>
    %19 = arith.addi %8, %18 : vector<16x1xi32>
    %c0_i32_7 = arith.constant 0 : i32
    %20 = vector.broadcast %c0_i32_7 : i32 to vector<16x1xi32>
    %21 = arith.cmpi sge, %19, %20 : vector<16x1xi32>
    %c-1_i32_8 = arith.constant -1 : i32
    %22 = vector.broadcast %c-1_i32_8 : i32 to vector<16x1xi32>
    %23 = arith.addi %8, %22 : vector<16x1xi32>
    %c8_i32_9 = arith.constant 8 : i32
    %24 = vector.broadcast %c8_i32_9 : i32 to vector<16x1xi32>
    %25 = arith.cmpi slt, %23, %24 : vector<16x1xi32>
    %26 = arith.andi %21, %25 : vector<16x1xi1>
    %c1_i32 = arith.constant 1 : i32
    %27 = vector.broadcast %c1_i32 : i32 to vector<16x1xi32>
    %28 = arith.addi %8, %27 : vector<16x1xi32>
    %c0_i32_10 = arith.constant 0 : i32
    %29 = vector.broadcast %c0_i32_10 : i32 to vector<16x1xi32>
    %30 = arith.cmpi sge, %28, %29 : vector<16x1xi32>
    %c1_i32_11 = arith.constant 1 : i32
    %31 = vector.broadcast %c1_i32_11 : i32 to vector<16x1xi32>
    %32 = arith.addi %8, %31 : vector<16x1xi32>
    %c8_i32_12 = arith.constant 8 : i32
    %33 = vector.broadcast %c8_i32_12 : i32 to vector<16x1xi32>
    %34 = arith.cmpi slt, %32, %33 : vector<16x1xi32>
    %35 = arith.andi %30, %34 : vector<16x1xi1>
    %c2_i32 = arith.constant 2 : i32
    %36 = vector.broadcast %c2_i32 : i32 to vector<16x1xi32>
    %37 = arith.addi %8, %36 : vector<16x1xi32>
    %c0_i32_13 = arith.constant 0 : i32
    %38 = vector.broadcast %c0_i32_13 : i32 to vector<16x1xi32>
    %39 = arith.cmpi sge, %37, %38 : vector<16x1xi32>
    %c2_i32_14 = arith.constant 2 : i32
    %40 = vector.broadcast %c2_i32_14 : i32 to vector<16x1xi32>
    %41 = arith.addi %8, %40 : vector<16x1xi32>
    %c8_i32_15 = arith.constant 8 : i32
    %42 = vector.broadcast %c8_i32_15 : i32 to vector<16x1xi32>
    %43 = arith.cmpi slt, %41, %42 : vector<16x1xi32>
    %44 = arith.andi %39, %43 : vector<16x1xi1>
    %45 = vector.extract_strided_slice %0 {offsets = [0, 0], sizes = [1, 32], strides = [1, 1]} : vector<14x32xf32> to vector<1x32xf32>
    %46 = vector.extract_strided_slice %0 {offsets = [1, 0], sizes = [1, 32], strides = [1, 1]} : vector<14x32xf32> to vector<1x32xf32>
    %cst = arith.constant dense<0.000000e+00> : vector<16xf32>
    %47 = vector.multi_reduction <add>, %6, %cst [1] : vector<16x32xf32> to vector<16xf32>
    %48 = vector.shape_cast %47 : vector<16xf32> to vector<16x1xf32>
    %cst_16 = arith.constant 3.200000e+01 : f32
    %49 = vector.broadcast %cst_16 : f32 to vector<16x1xf32>
    %50 = arith.divf %48, %49 : vector<16x1xf32>
    %51 = arith.mulf %6, %6 : vector<16x32xf32>
    %cst_17 = arith.constant dense<0.000000e+00> : vector<16xf32>
    %52 = vector.multi_reduction <add>, %51, %cst_17 [1] : vector<16x32xf32> to vector<16xf32>
    %53 = vector.shape_cast %52 : vector<16xf32> to vector<16x1xf32>
    %cst_18 = arith.constant 3.200000e+01 : f32
    %54 = vector.broadcast %cst_18 : f32 to vector<16x1xf32>
    %55 = arith.divf %53, %54 : vector<16x1xf32>
    %56 = arith.mulf %50, %50 : vector<16x1xf32>
    %57 = arith.subf %55, %56 : vector<16x1xf32>
    %58 = vector.broadcast %50 : vector<16x1xf32> to vector<16x32xf32>
    %59 = arith.subf %6, %58 : vector<16x32xf32>
    %cst_19 = arith.constant 9.99999974E-6 : f32
    %60 = vector.broadcast %cst_19 : f32 to vector<16x1xf32>
    %61 = arith.addf %57, %60 : vector<16x1xf32>
    %62 = math.rsqrt %61 : vector<16x1xf32>
    %63 = vector.broadcast %62 : vector<16x1xf32> to vector<16x32xf32>
    %64 = arith.mulf %59, %63 : vector<16x32xf32>
    %65 = vector.broadcast %45 : vector<1x32xf32> to vector<16x32xf32>
    %66 = arith.mulf %64, %65 : vector<16x32xf32>
    %67 = vector.broadcast %46 : vector<1x32xf32> to vector<16x32xf32>
    %68 = arith.addf %66, %67 : vector<16x32xf32>
    %c0_20 = arith.constant 0 : index
    %c0_21 = arith.constant 0 : index
    %c0_22 = arith.constant 0 : index
    %69 = vector.load %arg4[%c0_20, %c0_21, %c0_22] : memref<2x5x32xf32, #tpu.memory_space<vmem>>, vector<1x5x32xf32>
    %70 = vector.shape_cast %69 : vector<1x5x32xf32> to vector<5x32xf32>
    %cst_23 = arith.constant 0.000000e+00 : f32
    %71 = vector.broadcast %cst_23 : f32 to vector<16x32xf32>
    %c2_i32_24 = arith.constant 2 : i32
    %72 = tpu.dynamic_rotate %68 by %c2_i32_24 dim 0 : vector<16x32xf32>, i32 -> vector<16x32xf32>
    %cst_25 = arith.constant 0.000000e+00 : f32
    %73 = vector.shape_cast %17 : vector<16x1xi1> to vector<16x1xi1>
    %74 = vector.broadcast %73 : vector<16x1xi1> to vector<16x32xi1>
    %75 = vector.broadcast %cst_25 : f32 to vector<16x32xf32>
    %76 = arith.select %74, %72, %75 : vector<16x32xi1>, vector<16x32xf32>
    %77 = vector.extract_strided_slice %70 {offsets = [0, 0], sizes = [1, 32], strides = [1, 1]} : vector<5x32xf32> to vector<1x32xf32>
    %78 = vector.broadcast %77 : vector<1x32xf32> to vector<16x32xf32>
    %79 = arith.mulf %78, %76 : vector<16x32xf32>
    %80 = arith.addf %71, %79 : vector<16x32xf32>
    %c1_i32_26 = arith.constant 1 : i32
    %81 = tpu.dynamic_rotate %68 by %c1_i32_26 dim 0 : vector<16x32xf32>, i32 -> vector<16x32xf32>
    %cst_27 = arith.constant 0.000000e+00 : f32
    %82 = vector.shape_cast %26 : vector<16x1xi1> to vector<16x1xi1>
    %83 = vector.broadcast %82 : vector<16x1xi1> to vector<16x32xi1>
    %84 = vector.broadcast %cst_27 : f32 to vector<16x32xf32>
    %85 = arith.select %83, %81, %84 : vector<16x32xi1>, vector<16x32xf32>
    %86 = vector.extract_strided_slice %70 {offsets = [1, 0], sizes = [1, 32], strides = [1, 1]} : vector<5x32xf32> to vector<1x32xf32>
    %87 = vector.broadcast %86 : vector<1x32xf32> to vector<16x32xf32>
    %88 = arith.mulf %87, %85 : vector<16x32xf32>
    %89 = arith.addf %80, %88 : vector<16x32xf32>
    %90 = vector.extract_strided_slice %70 {offsets = [2, 0], sizes = [1, 32], strides = [1, 1]} : vector<5x32xf32> to vector<1x32xf32>
    %91 = vector.broadcast %90 : vector<1x32xf32> to vector<16x32xf32>
    %92 = arith.mulf %91, %68 : vector<16x32xf32>
    %93 = arith.addf %89, %92 : vector<16x32xf32>
    %c15_i32 = arith.constant 15 : i32
    %94 = tpu.dynamic_rotate %68 by %c15_i32 dim 0 : vector<16x32xf32>, i32 -> vector<16x32xf32>
    %cst_28 = arith.constant 0.000000e+00 : f32
    %95 = vector.shape_cast %35 : vector<16x1xi1> to vector<16x1xi1>
    %96 = vector.broadcast %95 : vector<16x1xi1> to vector<16x32xi1>
    %97 = vector.broadcast %cst_28 : f32 to vector<16x32xf32>
    %98 = arith.select %96, %94, %97 : vector<16x32xi1>, vector<16x32xf32>
    %99 = vector.extract_strided_slice %70 {offsets = [3, 0], sizes = [1, 32], strides = [1, 1]} : vector<5x32xf32> to vector<1x32xf32>
    %100 = vector.broadcast %99 : vector<1x32xf32> to vector<16x32xf32>
    %101 = arith.mulf %100, %98 : vector<16x32xf32>
    %102 = arith.addf %93, %101 : vector<16x32xf32>
    %c14_i32 = arith.constant 14 : i32
    %103 = tpu.dynamic_rotate %68 by %c14_i32 dim 0 : vector<16x32xf32>, i32 -> vector<16x32xf32>
    %cst_29 = arith.constant 0.000000e+00 : f32
    %104 = vector.shape_cast %44 : vector<16x1xi1> to vector<16x1xi1>
    %105 = vector.broadcast %104 : vector<16x1xi1> to vector<16x32xi1>
    %106 = vector.broadcast %cst_29 : f32 to vector<16x32xf32>
    %107 = arith.select %105, %103, %106 : vector<16x32xi1>, vector<16x32xf32>
    %108 = vector.extract_strided_slice %70 {offsets = [4, 0], sizes = [1, 32], strides = [1, 1]} : vector<5x32xf32> to vector<1x32xf32>
    %109 = vector.broadcast %108 : vector<1x32xf32> to vector<16x32xf32>
    %110 = arith.mulf %109, %107 : vector<16x32xf32>
    %111 = arith.addf %102, %110 : vector<16x32xf32>
    %112 = vector.extract_strided_slice %0 {offsets = [4, 0], sizes = [1, 32], strides = [1, 1]} : vector<14x32xf32> to vector<1x32xf32>
    %113 = vector.broadcast %112 : vector<1x32xf32> to vector<16x32xf32>
    %114 = arith.addf %111, %113 : vector<16x32xf32>
    %c0_30 = arith.constant 0 : index
    %c0_31 = arith.constant 0 : index
    %c0_32 = arith.constant 0 : index
    %115 = vector.load %arg5[%c0_30, %c0_31, %c0_32] : memref<2x32x32xf32, #tpu.memory_space<vmem>>, vector<1x32x32xf32>
    %116 = vector.shape_cast %115 : vector<1x32x32xf32> to vector<32x32xf32>
    %cst_33 = arith.constant dense<0.000000e+00> : vector<16x32xf32>
    %117 = tpu.matmul %114, %116, %cst_33 {dimension_numbers = #tpu.dot_dimension_numbers<[1], [0], [0], [1], [0, 0, 1, 1], [], []>} : vector<16x32xf32>, vector<32x32xf32>, vector<16x32xf32> -> vector<16x32xf32>
    %118 = vector.extract_strided_slice %0 {offsets = [6, 0], sizes = [1, 32], strides = [1, 1]} : vector<14x32xf32> to vector<1x32xf32>
    %119 = vector.broadcast %118 : vector<1x32xf32> to vector<16x32xf32>
    %120 = arith.addf %117, %119 : vector<16x32xf32>
    %121 = arith.addf %120, %6 : vector<16x32xf32>
    %122 = vector.extract_strided_slice %0 {offsets = [2, 0], sizes = [1, 32], strides = [1, 1]} : vector<14x32xf32> to vector<1x32xf32>
    %123 = vector.extract_strided_slice %0 {offsets = [3, 0], sizes = [1, 32], strides = [1, 1]} : vector<14x32xf32> to vector<1x32xf32>
    %cst_34 = arith.constant dense<0.000000e+00> : vector<16xf32>
    %124 = vector.multi_reduction <add>, %121, %cst_34 [1] : vector<16x32xf32> to vector<16xf32>
    %125 = vector.shape_cast %124 : vector<16xf32> to vector<16x1xf32>
    %cst_35 = arith.constant 3.200000e+01 : f32
    %126 = vector.broadcast %cst_35 : f32 to vector<16x1xf32>
    %127 = arith.divf %125, %126 : vector<16x1xf32>
    %128 = arith.mulf %121, %121 : vector<16x32xf32>
    %cst_36 = arith.constant dense<0.000000e+00> : vector<16xf32>
    %129 = vector.multi_reduction <add>, %128, %cst_36 [1] : vector<16x32xf32> to vector<16xf32>
    %130 = vector.shape_cast %129 : vector<16xf32> to vector<16x1xf32>
    %cst_37 = arith.constant 3.200000e+01 : f32
    %131 = vector.broadcast %cst_37 : f32 to vector<16x1xf32>
    %132 = arith.divf %130, %131 : vector<16x1xf32>
    %133 = arith.mulf %127, %127 : vector<16x1xf32>
    %134 = arith.subf %132, %133 : vector<16x1xf32>
    %135 = vector.broadcast %127 : vector<16x1xf32> to vector<16x32xf32>
    %136 = arith.subf %121, %135 : vector<16x32xf32>
    %cst_38 = arith.constant 9.99999974E-6 : f32
    %137 = vector.broadcast %cst_38 : f32 to vector<16x1xf32>
    %138 = arith.addf %134, %137 : vector<16x1xf32>
    %139 = math.rsqrt %138 : vector<16x1xf32>
    %140 = vector.broadcast %139 : vector<16x1xf32> to vector<16x32xf32>
    %141 = arith.mulf %136, %140 : vector<16x32xf32>
    %142 = vector.broadcast %122 : vector<1x32xf32> to vector<16x32xf32>
    %143 = arith.mulf %141, %142 : vector<16x32xf32>
    %144 = vector.broadcast %123 : vector<1x32xf32> to vector<16x32xf32>
    %145 = arith.addf %143, %144 : vector<16x32xf32>
    %c1 = arith.constant 1 : index
    %c0_39 = arith.constant 0 : index
    %c0_40 = arith.constant 0 : index
    %146 = vector.load %arg4[%c1, %c0_39, %c0_40] : memref<2x5x32xf32, #tpu.memory_space<vmem>>, vector<1x5x32xf32>
    %147 = vector.shape_cast %146 : vector<1x5x32xf32> to vector<5x32xf32>
    %cst_41 = arith.constant 0.000000e+00 : f32
    %148 = vector.broadcast %cst_41 : f32 to vector<16x32xf32>
    %c2_i32_42 = arith.constant 2 : i32
    %149 = tpu.dynamic_rotate %145 by %c2_i32_42 dim 0 : vector<16x32xf32>, i32 -> vector<16x32xf32>
    %cst_43 = arith.constant 0.000000e+00 : f32
    %150 = vector.shape_cast %17 : vector<16x1xi1> to vector<16x1xi1>
    %151 = vector.broadcast %150 : vector<16x1xi1> to vector<16x32xi1>
    %152 = vector.broadcast %cst_43 : f32 to vector<16x32xf32>
    %153 = arith.select %151, %149, %152 : vector<16x32xi1>, vector<16x32xf32>
    %154 = vector.extract_strided_slice %147 {offsets = [0, 0], sizes = [1, 32], strides = [1, 1]} : vector<5x32xf32> to vector<1x32xf32>
    %155 = vector.broadcast %154 : vector<1x32xf32> to vector<16x32xf32>
    %156 = arith.mulf %155, %153 : vector<16x32xf32>
    %157 = arith.addf %148, %156 : vector<16x32xf32>
    %c1_i32_44 = arith.constant 1 : i32
    %158 = tpu.dynamic_rotate %145 by %c1_i32_44 dim 0 : vector<16x32xf32>, i32 -> vector<16x32xf32>
    %cst_45 = arith.constant 0.000000e+00 : f32
    %159 = vector.shape_cast %26 : vector<16x1xi1> to vector<16x1xi1>
    %160 = vector.broadcast %159 : vector<16x1xi1> to vector<16x32xi1>
    %161 = vector.broadcast %cst_45 : f32 to vector<16x32xf32>
    %162 = arith.select %160, %158, %161 : vector<16x32xi1>, vector<16x32xf32>
    %163 = vector.extract_strided_slice %147 {offsets = [1, 0], sizes = [1, 32], strides = [1, 1]} : vector<5x32xf32> to vector<1x32xf32>
    %164 = vector.broadcast %163 : vector<1x32xf32> to vector<16x32xf32>
    %165 = arith.mulf %164, %162 : vector<16x32xf32>
    %166 = arith.addf %157, %165 : vector<16x32xf32>
    %167 = vector.extract_strided_slice %147 {offsets = [2, 0], sizes = [1, 32], strides = [1, 1]} : vector<5x32xf32> to vector<1x32xf32>
    %168 = vector.broadcast %167 : vector<1x32xf32> to vector<16x32xf32>
    %169 = arith.mulf %168, %145 : vector<16x32xf32>
    %170 = arith.addf %166, %169 : vector<16x32xf32>
    %c15_i32_46 = arith.constant 15 : i32
    %171 = tpu.dynamic_rotate %145 by %c15_i32_46 dim 0 : vector<16x32xf32>, i32 -> vector<16x32xf32>
    %cst_47 = arith.constant 0.000000e+00 : f32
    %172 = vector.shape_cast %35 : vector<16x1xi1> to vector<16x1xi1>
    %173 = vector.broadcast %172 : vector<16x1xi1> to vector<16x32xi1>
    %174 = vector.broadcast %cst_47 : f32 to vector<16x32xf32>
    %175 = arith.select %173, %171, %174 : vector<16x32xi1>, vector<16x32xf32>
    %176 = vector.extract_strided_slice %147 {offsets = [3, 0], sizes = [1, 32], strides = [1, 1]} : vector<5x32xf32> to vector<1x32xf32>
    %177 = vector.broadcast %176 : vector<1x32xf32> to vector<16x32xf32>
    %178 = arith.mulf %177, %175 : vector<16x32xf32>
    %179 = arith.addf %170, %178 : vector<16x32xf32>
    %c14_i32_48 = arith.constant 14 : i32
    %180 = tpu.dynamic_rotate %145 by %c14_i32_48 dim 0 : vector<16x32xf32>, i32 -> vector<16x32xf32>
    %cst_49 = arith.constant 0.000000e+00 : f32
    %181 = vector.shape_cast %44 : vector<16x1xi1> to vector<16x1xi1>
    %182 = vector.broadcast %181 : vector<16x1xi1> to vector<16x32xi1>
    %183 = vector.broadcast %cst_49 : f32 to vector<16x32xf32>
    %184 = arith.select %182, %180, %183 : vector<16x32xi1>, vector<16x32xf32>
    %185 = vector.extract_strided_slice %147 {offsets = [4, 0], sizes = [1, 32], strides = [1, 1]} : vector<5x32xf32> to vector<1x32xf32>
    %186 = vector.broadcast %185 : vector<1x32xf32> to vector<16x32xf32>
    %187 = arith.mulf %186, %184 : vector<16x32xf32>
    %188 = arith.addf %179, %187 : vector<16x32xf32>
    %189 = vector.extract_strided_slice %0 {offsets = [5, 0], sizes = [1, 32], strides = [1, 1]} : vector<14x32xf32> to vector<1x32xf32>
    %190 = vector.broadcast %189 : vector<1x32xf32> to vector<16x32xf32>
    %191 = arith.addf %188, %190 : vector<16x32xf32>
    %c1_50 = arith.constant 1 : index
    %c0_51 = arith.constant 0 : index
    %c0_52 = arith.constant 0 : index
    %192 = vector.load %arg5[%c1_50, %c0_51, %c0_52] : memref<2x32x32xf32, #tpu.memory_space<vmem>>, vector<1x32x32xf32>
    %193 = vector.shape_cast %192 : vector<1x32x32xf32> to vector<32x32xf32>
    %cst_53 = arith.constant dense<0.000000e+00> : vector<16x32xf32>
    %194 = tpu.matmul %191, %193, %cst_53 {dimension_numbers = #tpu.dot_dimension_numbers<[1], [0], [0], [1], [0, 0, 1, 1], [], []>} : vector<16x32xf32>, vector<32x32xf32>, vector<16x32xf32> -> vector<16x32xf32>
    %195 = vector.extract_strided_slice %0 {offsets = [7, 0], sizes = [1, 32], strides = [1, 1]} : vector<14x32xf32> to vector<1x32xf32>
    %196 = vector.broadcast %195 : vector<1x32xf32> to vector<16x32xf32>
    %197 = arith.addf %194, %196 : vector<16x32xf32>
    %198 = arith.addf %197, %121 : vector<16x32xf32>
    %199 = vector.extract_strided_slice %0 {offsets = [8, 0], sizes = [1, 32], strides = [1, 1]} : vector<14x32xf32> to vector<1x32xf32>
    %200 = vector.extract_strided_slice %0 {offsets = [9, 0], sizes = [1, 32], strides = [1, 1]} : vector<14x32xf32> to vector<1x32xf32>
    %cst_54 = arith.constant dense<0.000000e+00> : vector<16xf32>
    %201 = vector.multi_reduction <add>, %198, %cst_54 [1] : vector<16x32xf32> to vector<16xf32>
    %202 = vector.shape_cast %201 : vector<16xf32> to vector<16x1xf32>
    %cst_55 = arith.constant 3.200000e+01 : f32
    %203 = vector.broadcast %cst_55 : f32 to vector<16x1xf32>
    %204 = arith.divf %202, %203 : vector<16x1xf32>
    %205 = arith.mulf %198, %198 : vector<16x32xf32>
    %cst_56 = arith.constant dense<0.000000e+00> : vector<16xf32>
    %206 = vector.multi_reduction <add>, %205, %cst_56 [1] : vector<16x32xf32> to vector<16xf32>
    %207 = vector.shape_cast %206 : vector<16xf32> to vector<16x1xf32>
    %cst_57 = arith.constant 3.200000e+01 : f32
    %208 = vector.broadcast %cst_57 : f32 to vector<16x1xf32>
    %209 = arith.divf %207, %208 : vector<16x1xf32>
    %210 = arith.mulf %204, %204 : vector<16x1xf32>
    %211 = arith.subf %209, %210 : vector<16x1xf32>
    %212 = vector.broadcast %204 : vector<16x1xf32> to vector<16x32xf32>
    %213 = arith.subf %198, %212 : vector<16x32xf32>
    %cst_58 = arith.constant 9.99999974E-6 : f32
    %214 = vector.broadcast %cst_58 : f32 to vector<16x1xf32>
    %215 = arith.addf %211, %214 : vector<16x1xf32>
    %216 = math.rsqrt %215 : vector<16x1xf32>
    %217 = vector.broadcast %216 : vector<16x1xf32> to vector<16x32xf32>
    %218 = arith.mulf %213, %217 : vector<16x32xf32>
    %219 = vector.broadcast %199 : vector<1x32xf32> to vector<16x32xf32>
    %220 = arith.mulf %218, %219 : vector<16x32xf32>
    %221 = vector.broadcast %200 : vector<1x32xf32> to vector<16x32xf32>
    %222 = arith.addf %220, %221 : vector<16x32xf32>
    %c0_59 = arith.constant 0 : index
    %c0_60 = arith.constant 0 : index
    %223 = vector.load %arg6[%c0_59, %c0_60] : memref<32x384xf32, #tpu.memory_space<vmem>>, vector<32x384xf32>
    %cst_61 = arith.constant dense<0.000000e+00> : vector<16x384xf32>
    %224 = tpu.matmul %222, %223, %cst_61 {dimension_numbers = #tpu.dot_dimension_numbers<[1], [0], [0], [1], [0, 0, 1, 1], [], []>} : vector<16x32xf32>, vector<32x384xf32>, vector<16x384xf32> -> vector<16x384xf32>
    %c0_62 = arith.constant 0 : index
    %c0_63 = arith.constant 0 : index
    %225 = vector.load %arg7[%c0_62, %c0_63] : memref<1x384xf32, #tpu.memory_space<vmem>>, vector<1x384xf32>
    %226 = vector.broadcast %225 : vector<1x384xf32> to vector<16x384xf32>
    %227 = arith.addf %224, %226 : vector<16x384xf32>
    %228 = vector.extract_strided_slice %227 {offsets = [0, 0], sizes = [16, 128], strides = [1, 1]} : vector<16x384xf32> to vector<16x128xf32>
    %229 = vector.shape_cast %228 : vector<16x128xf32> to vector<2x8x128xf32>
    %230 = vector.extract_strided_slice %227 {offsets = [0, 128], sizes = [16, 128], strides = [1, 1]} : vector<16x384xf32> to vector<16x128xf32>
    %231 = vector.shape_cast %230 : vector<16x128xf32> to vector<2x8x128xf32>
    %232 = vector.extract_strided_slice %227 {offsets = [0, 256], sizes = [16, 128], strides = [1, 1]} : vector<16x384xf32> to vector<16x128xf32>
    %233 = vector.shape_cast %232 : vector<16x128xf32> to vector<2x8x128xf32>
    "tpu.trace_start"() <{level = 10 : i32, message = "bqd,bkd->bqk"}> : () -> ()
    %cst_64 = arith.constant dense<0.000000e+00> : vector<2x8x8xf32>
    %234 = tpu.matmul %229, %231, %cst_64 {dimension_numbers = #tpu.dot_dimension_numbers<[2], [2], [1], [1], [0, 0, 0, 1, 1, 1], [0], [0]>} : vector<2x8x128xf32>, vector<2x8x128xf32>, vector<2x8x8xf32> -> vector<2x8x8xf32>
    "tpu.trace_stop"() : () -> ()
    %cst_65 = arith.constant dense<0xFF800000> : vector<2x8xf32>
    %235 = vector.multi_reduction <maximumf>, %234, %cst_65 [2] : vector<2x8x8xf32> to vector<2x8xf32>
    %236 = vector.shape_cast %235 : vector<2x8xf32> to vector<2x8x1xf32>
    %237 = vector.broadcast %236 : vector<2x8x1xf32> to vector<2x8x8xf32>
    %238 = arith.subf %234, %237 : vector<2x8x8xf32>
    %239 = math.exp %238 : vector<2x8x8xf32>
    %cst_66 = arith.constant dense<0.000000e+00> : vector<2x8xf32>
    %240 = vector.multi_reduction <add>, %239, %cst_66 [2] : vector<2x8x8xf32> to vector<2x8xf32>
    %241 = vector.shape_cast %240 : vector<2x8xf32> to vector<2x8x1xf32>
    %242 = tpu.reciprocal %241 {approx = true} : vector<2x8x1xf32> -> vector<2x8x1xf32>
    %243 = vector.broadcast %242 : vector<2x8x1xf32> to vector<2x8x8xf32>
    %244 = arith.mulf %239, %243 : vector<2x8x8xf32>
    "tpu.trace_start"() <{level = 10 : i32, message = "bqk,bkd->bqd"}> : () -> ()
    %cst_67 = arith.constant dense<0.000000e+00> : vector<2x8x128xf32>
    %245 = tpu.matmul %244, %233, %cst_67 {dimension_numbers = #tpu.dot_dimension_numbers<[2], [1], [1], [2], [0, 0, 0, 1, 1, 2], [0], [0]>} : vector<2x8x8xf32>, vector<2x8x128xf32>, vector<2x8x128xf32> -> vector<2x8x128xf32>
    "tpu.trace_stop"() : () -> ()
    %246 = vector.shape_cast %245 : vector<2x8x128xf32> to vector<16x128xf32>
    %c0_68 = arith.constant 0 : index
    %c0_69 = arith.constant 0 : index
    %247 = vector.load %arg8[%c0_68, %c0_69] : memref<128x32xf32, #tpu.memory_space<vmem>>, vector<128x32xf32>
    %cst_70 = arith.constant dense<0.000000e+00> : vector<16x32xf32>
    %248 = tpu.matmul %246, %247, %cst_70 {dimension_numbers = #tpu.dot_dimension_numbers<[1], [0], [0], [1], [0, 0, 1, 1], [], []>} : vector<16x128xf32>, vector<128x32xf32>, vector<16x32xf32> -> vector<16x32xf32>
    %249 = vector.extract_strided_slice %0 {offsets = [10, 0], sizes = [1, 32], strides = [1, 1]} : vector<14x32xf32> to vector<1x32xf32>
    %250 = vector.broadcast %249 : vector<1x32xf32> to vector<16x32xf32>
    %251 = arith.addf %248, %250 : vector<16x32xf32>
    %252 = arith.addf %251, %198 : vector<16x32xf32>
    %253 = vector.extract_strided_slice %0 {offsets = [11, 0], sizes = [1, 32], strides = [1, 1]} : vector<14x32xf32> to vector<1x32xf32>
    %254 = vector.extract_strided_slice %0 {offsets = [12, 0], sizes = [1, 32], strides = [1, 1]} : vector<14x32xf32> to vector<1x32xf32>
    %cst_71 = arith.constant dense<0.000000e+00> : vector<16xf32>
    %255 = vector.multi_reduction <add>, %252, %cst_71 [1] : vector<16x32xf32> to vector<16xf32>
    %256 = vector.shape_cast %255 : vector<16xf32> to vector<16x1xf32>
    %cst_72 = arith.constant 3.200000e+01 : f32
    %257 = vector.broadcast %cst_72 : f32 to vector<16x1xf32>
    %258 = arith.divf %256, %257 : vector<16x1xf32>
    %259 = arith.mulf %252, %252 : vector<16x32xf32>
    %cst_73 = arith.constant dense<0.000000e+00> : vector<16xf32>
    %260 = vector.multi_reduction <add>, %259, %cst_73 [1] : vector<16x32xf32> to vector<16xf32>
    %261 = vector.shape_cast %260 : vector<16xf32> to vector<16x1xf32>
    %cst_74 = arith.constant 3.200000e+01 : f32
    %262 = vector.broadcast %cst_74 : f32 to vector<16x1xf32>
    %263 = arith.divf %261, %262 : vector<16x1xf32>
    %264 = arith.mulf %258, %258 : vector<16x1xf32>
    %265 = arith.subf %263, %264 : vector<16x1xf32>
    %266 = vector.broadcast %258 : vector<16x1xf32> to vector<16x32xf32>
    %267 = arith.subf %252, %266 : vector<16x32xf32>
    %cst_75 = arith.constant 9.99999974E-6 : f32
    %268 = vector.broadcast %cst_75 : f32 to vector<16x1xf32>
    %269 = arith.addf %265, %268 : vector<16x1xf32>
    %270 = math.rsqrt %269 : vector<16x1xf32>
    %271 = vector.broadcast %270 : vector<16x1xf32> to vector<16x32xf32>
    %272 = arith.mulf %267, %271 : vector<16x32xf32>
    %273 = vector.broadcast %253 : vector<1x32xf32> to vector<16x32xf32>
    %274 = arith.mulf %272, %273 : vector<16x32xf32>
    %275 = vector.broadcast %254 : vector<1x32xf32> to vector<16x32xf32>
    %276 = arith.addf %274, %275 : vector<16x32xf32>
    %c0_76 = arith.constant 0 : index
    %c0_77 = arith.constant 0 : index
    %277 = vector.load %arg9[%c0_76, %c0_77] : memref<32x32xf32, #tpu.memory_space<vmem>>, vector<32x32xf32>
    %cst_78 = arith.constant dense<0.000000e+00> : vector<16x32xf32>
    %278 = tpu.matmul %276, %277, %cst_78 {dimension_numbers = #tpu.dot_dimension_numbers<[1], [0], [0], [1], [0, 0, 1, 1], [], []>} : vector<16x32xf32>, vector<32x32xf32>, vector<16x32xf32> -> vector<16x32xf32>
    %279 = vector.extract_strided_slice %0 {offsets = [13, 0], sizes = [1, 32], strides = [1, 1]} : vector<14x32xf32> to vector<1x32xf32>
    %280 = vector.broadcast %279 : vector<1x32xf32> to vector<16x32xf32>
    %281 = arith.addf %278, %280 : vector<16x32xf32>
    %282 = arith.addf %281, %252 : vector<16x32xf32>
    %283 = vector.shape_cast %282 : vector<16x32xf32> to vector<2x8x32xf32>
    %c0_79 = arith.constant 0 : index
    %c0_80 = arith.constant 0 : index
    %c0_81 = arith.constant 0 : index
    %284 = vector.load %arg10[%c0_79, %c0_80, %c0_81] : memref<2x8x32xf32, #tpu.memory_space<vmem>>, vector<2x8x32xf32>
    tpu.vector_store %arg10[%c0_79, %c0_80, %c0_81], %283 {strides = array<i32>} : memref<2x8x32xf32, #tpu.memory_space<vmem>>, vector<2x8x32xf32>,
    return
  }
  func.func @transform_0(%arg0: i32) -> (i32, i32, i32) {
    %c0_i32 = arith.constant 0 : i32
    %c0_i32_0 = arith.constant 0 : i32
    %c0_i32_1 = arith.constant 0 : i32
    return %arg0, %c0_i32, %c0_i32_0 : i32, i32, i32
  }
  func.func @transform_1(%arg0: i32) -> (i32, i32) {
    %c0_i32 = arith.constant 0 : i32
    %c0_i32_0 = arith.constant 0 : i32
    %c0_i32_1 = arith.constant 0 : i32
    return %c0_i32, %c0_i32_0 : i32, i32
  }
  func.func @transform_2(%arg0: i32) -> (i32, i32) {
    %c0_i32 = arith.constant 0 : i32
    %c0_i32_0 = arith.constant 0 : i32
    %c0_i32_1 = arith.constant 0 : i32
    return %c0_i32, %c0_i32_0 : i32, i32
  }
  func.func @transform_3(%arg0: i32) -> (i32, i32, i32) {
    %c0_i32 = arith.constant 0 : i32
    %c0_i32_0 = arith.constant 0 : i32
    %c0_i32_1 = arith.constant 0 : i32
    %c0_i32_2 = arith.constant 0 : i32
    return %c0_i32, %c0_i32_0, %c0_i32_1 : i32, i32, i32
  }
  func.func @transform_4(%arg0: i32) -> (i32, i32, i32) {
    %c0_i32 = arith.constant 0 : i32
    %c0_i32_0 = arith.constant 0 : i32
    %c0_i32_1 = arith.constant 0 : i32
    %c0_i32_2 = arith.constant 0 : i32
    return %c0_i32, %c0_i32_0, %c0_i32_1 : i32, i32, i32
  }
  func.func @transform_5(%arg0: i32) -> (i32, i32) {
    %c0_i32 = arith.constant 0 : i32
    %c0_i32_0 = arith.constant 0 : i32
    %c0_i32_1 = arith.constant 0 : i32
    return %c0_i32, %c0_i32_0 : i32, i32
  }
  func.func @transform_6(%arg0: i32) -> (i32, i32) {
    %c0_i32 = arith.constant 0 : i32
    %c0_i32_0 = arith.constant 0 : i32
    %c0_i32_1 = arith.constant 0 : i32
    return %c0_i32, %c0_i32_0 : i32, i32
  }
  func.func @transform_7(%arg0: i32) -> (i32, i32) {
    %c0_i32 = arith.constant 0 : i32
    %c0_i32_0 = arith.constant 0 : i32
    %c0_i32_1 = arith.constant 0 : i32
    return %c0_i32, %c0_i32_0 : i32, i32
  }
  func.func @transform_8(%arg0: i32) -> (i32, i32) {
    %c0_i32 = arith.constant 0 : i32
    %c0_i32_0 = arith.constant 0 : i32
    %c0_i32_1 = arith.constant 0 : i32
    return %c0_i32, %c0_i32_0 : i32, i32
  }
  func.func @transform_9(%arg0: i32) -> (i32, i32, i32) {
    %c0_i32 = arith.constant 0 : i32
    %c0_i32_0 = arith.constant 0 : i32
    %c0_i32_1 = arith.constant 0 : i32
    return %arg0, %c0_i32, %c0_i32_0 : i32, i32, i32
  }
}

</mosaic_0001>

<llo_original>
// kernel: tpu_custom_call.1
$region0: #{tpu_custom_call.1}
  #allocation0 [shape = 'u32[]', space=smem, size = 0x4, offset = 0x4, fixed_abs, tag = 'smem constant byte address 0x4 - core index']
  #allocation1 [shape = 'u32[144,128]{1,0:T(1,128)}', space=vmem, size = 0x12000, scoped, tag = 'internal scratch']
  %s0 = inlined_call_operand.hbm [shape: f32[2,8,32], index: 0, kind: input, shape index: {}]
  %s1 = inlined_call_operand.hbm [shape: f32[8,32], index: 1, kind: input, shape index: {}]
  %s2 = inlined_call_operand.hbm [shape: f32[14,32], index: 2, kind: input, shape index: {}]
  %s3 = inlined_call_operand.vmem [shape: f32[2,5,32], index: 3, kind: input, shape index: {}]
  %s4 = inlined_call_operand.vmem [shape: f32[2,32,32], index: 4, kind: input, shape index: {}]
  %s5 = inlined_call_operand.vmem [shape: f32[32,384], index: 5, kind: input, shape index: {}]
  %s6 = inlined_call_operand.vmem [shape: f32[1,384], index: 6, kind: input, shape index: {}]
  %s7 = inlined_call_operand.vmem [shape: f32[128,32], index: 7, kind: input, shape index: {}]
  %s8 = inlined_call_operand.vmem [shape: f32[32,32], index: 8, kind: input, shape index: {}]
  %s9 = inlined_call_operand.hbm [shape: f32[2,8,32], index: 9, kind: output, shape index: {}]
  %s10 = sld [smem:[#allocation0]]
  $region58: #{tpu_custom_call.1} parent=0
    _
  %s12 = ssub.s32 1, %s10
  %s13 = scalar_select 0, %s12, %s10
  $region1: #{tpu_custom_call.1} parent=0
    #allocation2 [shape = 'u8[8192]{0}', space=vmem, size = 0x2000, scoped, tag = 'input window, operand 0, single buffered']
    #allocation3 [shape = 's32[1]{0}', space=sflag, size = 0x4, scoped, tag = 'scoped memory for tpu_custom_call.1']
    #allocation4 [shape = 's32[1]{0}', space=sflag, size = 0x4, scoped, tag = 'scoped memory for tpu_custom_call.1']
    #allocation5 [shape = 'u8[4096]{0}', space=vmem, size = 0x1000, scoped, tag = 'input window, operand 1, single buffered']
    #allocation6 [shape = 's32[1]{0}', space=sflag, size = 0x4, scoped, tag = 'scoped memory for tpu_custom_call.1']
    #allocation7 [shape = 'u8[8192]{0}', space=vmem, size = 0x2000, scoped, tag = 'input window, operand 2, single buffered']
    #allocation8 [shape = 'u8[8192]{0}', space=vmem, size = 0x2000, scoped, tag = 'output window, operand 0, single buffered']
    %14 = vsyncpa [#allocation3], 0
    %15 = vsyncpa [#allocation6], 0
    %16 = vsyncpa [#allocation4], 0
    // Predicated region
    $region2: #{tpu_custom_call.1} parent=1 // pred_check
      _
    $region3: #{tpu_custom_call.1} parent=1 // pred_check_branch
      %18 = sbr.rel (0) target = $region5
    $region4: #{tpu_custom_call.1} parent=1 // pred_region
      %s20 = ssub.s32 256, 256
      %21 = vsyncadd [#allocation3], %s20
      %s22 = sshll.u32 [#allocation2], 4
      %s23 = int_to_ptr.vmem [resolvable:$true] %s22
      %28 = dma.hbm_to_vmem [thread:$0]  %s0, 256, %s23, [#allocation3], 128, 128, 8
    $region5: #{tpu_custom_call.1} parent=1 // pred_fallthru
      _
    // Predicated region
    $region6: #{tpu_custom_call.1} parent=1 // pred_check
      _
    $region7: #{tpu_custom_call.1} parent=1 // pred_check_branch
      %30 = sbr.rel (0) target = $region9
    $region8: #{tpu_custom_call.1} parent=1 // pred_region
      %s32 = ssub.s32 128, 128
      %33 = vsyncadd [#allocation6], %s32
      %s35 = sshll.u32 [#allocation5], 4
      %s36 = int_to_ptr.vmem [resolvable:$true] %s35
      %38 = dma.hbm_to_vmem [thread:$0]  %s1, 128, %s36, [#allocation6]
    $region9: #{tpu_custom_call.1} parent=1 // pred_fallthru
      _
    // Predicated region
    $region10: #{tpu_custom_call.1} parent=1 // pred_check
      _
    $region11: #{tpu_custom_call.1} parent=1 // pred_check_branch
      %40 = sbr.rel (0) target = $region13
    $region12: #{tpu_custom_call.1} parent=1 // pred_region
      %s42 = ssub.s32 256, 256
      %43 = vsyncadd [#allocation6], %s42
      %s44 = sshll.u32 [#allocation7], 4
      %s45 = int_to_ptr.vmem [resolvable:$true] %s44
      %50 = dma.hbm_to_vmem [thread:$0]  %s2, 256, %s45, [#allocation6], 128, 128, 8
    $region13: #{tpu_custom_call.1} parent=1 // pred_fallthru
      _
    // Predicated region
    $region14: #{tpu_custom_call.1} parent=1 // pred_check
      _
    $region15: #{tpu_custom_call.1} parent=1 // pred_check_branch
      %52 = sbr.rel (0) target = $region17
    $region16: #{tpu_custom_call.1} parent=1 // pred_region
      _
    $region17: #{tpu_custom_call.1} parent=1 // pred_fallthru
      _
    // Predicated region
    $region18: #{tpu_custom_call.1} parent=1 // pred_check
      _
    $region19: #{tpu_custom_call.1} parent=1 // pred_check_branch
      %54 = sbr.rel (0) target = $region21
    $region20: #{tpu_custom_call.1} parent=1 // pred_region
      _
    $region21: #{tpu_custom_call.1} parent=1 // pred_fallthru
      _
    // Predicated region
    $region22: #{tpu_custom_call.1} parent=1 // pred_check
      _
    $region23: #{tpu_custom_call.1} parent=1 // pred_check_branch
      %56 = sbr.rel (0) target = $region25
    $region24: #{tpu_custom_call.1} parent=1 // pred_region
      _
    $region25: #{tpu_custom_call.1} parent=1 // pred_fallthru
      _
    // Predicated region
    $region26: #{tpu_custom_call.1} parent=1 // pred_check
      _
    $region27: #{tpu_custom_call.1} parent=1 // pred_check_branch
      %58 = sbr.rel (0) target = $region29
    $region28: #{tpu_custom_call.1} parent=1 // pred_region
      _
    $region29: #{tpu_custom_call.1} parent=1 // pred_fallthru
      _
    // Predicated region
    $region30: #{tpu_custom_call.1} parent=1 // pred_check
      _
    $region31: #{tpu_custom_call.1} parent=1 // pred_check_branch
      %60 = sbr.rel (0) target = $region33
    $region32: #{tpu_custom_call.1} parent=1 // pred_region
      _
    $region33: #{tpu_custom_call.1} parent=1 // pred_fallthru
      _
    // Predicated region
    $region34: #{tpu_custom_call.1} parent=1 // pred_check
      _
    $region35: #{tpu_custom_call.1} parent=1 // pred_check_branch
      %62 = sbr.rel (0) target = $region37
    $region36: #{tpu_custom_call.1} parent=1 // pred_region
      _
    $region37: #{tpu_custom_call.1} parent=1 // pred_fallthru
      _
    // Predicated region
    $region38: #{tpu_custom_call.1} parent=1 // pred_check
      _
    $region39: #{tpu_custom_call.1} parent=1 // pred_check_branch
      %64 = sbr.rel (0) target = $region41
    $region40: #{tpu_custom_call.1} parent=1 // pred_region
      %65 = dma.done [#allocation3], 256
    $region41: #{tpu_custom_call.1} parent=1 // pred_fallthru
      _
    // Predicated region
    $region42: #{tpu_custom_call.1} parent=1 // pred_check
      _
    $region43: #{tpu_custom_call.1} parent=1 // pred_check_branch
      %67 = sbr.rel (0) target = $region45
    $region44: #{tpu_custom_call.1} parent=1 // pred_region
      %68 = dma.done [#allocation6], 128
    $region45: #{tpu_custom_call.1} parent=1 // pred_fallthru
      _
    // Predicated region
    $region46: #{tpu_custom_call.1} parent=1 // pred_check
      _
    $region47: #{tpu_custom_call.1} parent=1 // pred_check_branch
      %70 = sbr.rel (0) target = $region49
    $region48: #{tpu_custom_call.1} parent=1 // pred_region
      %71 = dma.done [#allocation6], 256
    $region49: #{tpu_custom_call.1} parent=1 // pred_fallthru
      _
    %v72 = vld [vmem:[#allocation7] sm:$0xff]
    %v73 = vld [vmem:[#allocation7 + $0x8] sm:$0x3f]
    %v74 = vld [vmem:[#allocation2] sm:$0xff]
    %v75 = vld [vmem:[#allocation2 + $0x8] sm:$0xff]
    %v76 = vld [vmem:[#allocation5] sm:$0xff]
    %v77 = vadd.f32 %v74, %v76
    %v78 = vadd.f32 %v75, %v76
    %v79 = vlaneseq
    %v80 = vshrl.u32 %v79, 7
    %v81 = vadd.s32 %v80, 4294967294
    %vm82 = vcmp.ge.s32.totalorder %v81, 0
    %vm83 = vcmp.lt.s32.totalorder %v81, 8
    %vm84 = vmand %vm82, %vm83
    %v85 = vadd.s32 %v80, 4294967295
    %vm86 = vcmp.ge.s32.totalorder %v85, 0
    %vm87 = vcmp.lt.s32.totalorder %v85, 8
    %vm88 = vmand %vm86, %vm87
    %v89 = vadd.s32 %v80, 1
    %vm90 = vcmp.ge.s32.totalorder %v89, 0
    %vm91 = vcmp.lt.s32.totalorder %v89, 8
    %vm92 = vmand %vm90, %vm91
    %v93 = vadd.s32 %v80, 2
    %vm94 = vcmp.ge.s32.totalorder %v93, 0
    %vm95 = vcmp.lt.s32.totalorder %v93, 8
    %vm96 = vmand %vm94, %vm95
    %vm97 = vcmask 261120
    %v98 = vsel %vm97, %v77, 0.0
    %99 = vadd.xlane.f32.xlu0 %v98
    %v100 = vpop.xlane.xlu0 %99
    %v101 = vsel %vm97, %v78, 0.0
    %102 = vadd.xlane.f32.xlu0 %v101
    %v103 = vpop.xlane.xlu0 %102
    %v104 = vrcp.pop 32.0
    %v105 = vmul.f32 %v100, %v104
    %v106 = vmul.f32 %v103, %v104
    %v107 = vmul.f32 %v77, %v77
    %v108 = vmul.f32 %v78, %v78
    %v109 = vsel %vm97, %v107, 0.0
    %110 = vadd.xlane.f32.xlu0 %v109
    %v111 = vpop.xlane.xlu0 %110
    %v112 = vsel %vm97, %v108, 0.0
    %113 = vadd.xlane.f32.xlu0 %v112
    %v114 = vpop.xlane.xlu0 %113
    %v115 = vmul.f32 %v111, %v104
    %v116 = vmul.f32 %v114, %v104
    %v117 = vmul.f32 %v105, %v105
    %v118 = vmul.f32 %v106, %v106
    %v119 = vsub.f32 %v115, %v117
    %v120 = vsub.f32 %v116, %v118
    %v121 = vsub.f32 %v77, %v105
    %v122 = vsub.f32 %v78, %v106
    %v123 = vadd.f32 %v119, 1e-05
    %v124 = vadd.f32 %v120, 1e-05
    %v125 = vrsqrt.pop %v123
    %v126 = vrsqrt.pop %v124
    %v127 = vmul.f32 %v121, %v125
    %v128 = vmul.f32 %v122, %v126
    %v129 = vlaneseq
    %v130 = vshrl.u32 %v129, 7
    %v131 = vsub.s32 0, %v130
    %v132 = vrot.slane %v72, %v131
    %v133 = vmul.f32 %v127, %v132
    %v134 = vmul.f32 %v128, %v132
    %v135 = vlaneseq
    %v136 = vshrl.u32 %v135, 7
    %v137 = vsub.s32 1, %v136
    %v138 = vrot.slane %v72, %v137
    %v139 = vadd.f32 %v133, %v138
    %v140 = vadd.f32 %v134, %v138
    %v141 = vld [vmem:[%s3] sm:$0x1f]
    %v142 = vrot.slane %v139, 6
    %v143 = vrot.slane %v140, 6
    %vm144 = vcmp.lt.s32.totalorder %v80, 2
    %v145 = vsel %vm144, %v142, %v143
    %v146 = vsel %vm144, %v143, %v142
    %v147 = vsel %vm84, 1, 0
    %vm148 = vcmp.eq.s32.totalorder %v147, 1
    %v149 = vsel %vm148, %v146, 0.0
    %v150 = vsel %vm148, %v145, 0.0
    %v151 = vlaneseq
    %v152 = vshrl.u32 %v151, 7
    %v153 = vsub.s32 0, %v152
    %v154 = vrot.slane %v141, %v153
    %v155 = vmul.f32 %v154, %v149
    %v156 = vmul.f32 %v154, %v150
    %v157 = vadd.f32 %v155, 0.0
    %v158 = vadd.f32 %v156, 0.0
    %v159 = vrot.slane %v139, 7
    %v160 = vrot.slane %v140, 7
    %vm161 = vcmp.lt.s32.totalorder %v80, 1
    %v162 = vsel %vm161, %v159, %v160
    %v163 = vsel %vm161, %v160, %v159
    %v164 = vsel %vm88, 1, 0
    %vm165 = vcmp.eq.s32.totalorder %v164, 1
    %v166 = vsel %vm165, %v163, 0.0
    %v167 = vsel %vm165, %v162, 0.0
    %v168 = vlaneseq
    %v169 = vshrl.u32 %v168, 7
    %v170 = vsub.s32 1, %v169
    %v171 = vrot.slane %v141, %v170
    %v172 = vmul.f32 %v171, %v166
    %v173 = vmul.f32 %v171, %v167
    %v174 = vadd.f32 %v157, %v172
    %v175 = vadd.f32 %v158, %v173
    %v176 = vlaneseq
    %v177 = vshrl.u32 %v176, 7
    %v178 = vsub.s32 2, %v177
    %v179 = vrot.slane %v141, %v178
    %v180 = vmul.f32 %v179, %v139
    %v181 = vmul.f32 %v179, %v140
    %v182 = vadd.f32 %v174, %v180
    %v183 = vadd.f32 %v175, %v181
    %v184 = vrot.slane %v139, 1
    %v185 = vrot.slane %v140, 1
    %vm186 = vcmp.lt.s32.totalorder %v80, 7
    %v187 = vsel %vm186, %v184, %v185
    %v188 = vsel %vm186, %v185, %v184
    %v189 = vsel %vm92, 1, 0
    %vm190 = vcmp.eq.s32.totalorder %v189, 1
    %v191 = vsel %vm190, %v187, 0.0
    %v192 = vsel %vm190, %v188, 0.0
    %v193 = vlaneseq
    %v194 = vshrl.u32 %v193, 7
    %v195 = vsub.s32 3, %v194
    %v196 = vrot.slane %v141, %v195
    %v197 = vmul.f32 %v196, %v191
    %v198 = vmul.f32 %v196, %v192
    %v199 = vadd.f32 %v182, %v197
    %v200 = vadd.f32 %v183, %v198
    %v201 = vrot.slane %v139, 2
    %v202 = vrot.slane %v140, 2
    %vm203 = vcmp.lt.s32.totalorder %v80, 6
    %v204 = vsel %vm203, %v201, %v202
    %v205 = vsel %vm203, %v202, %v201
    %v206 = vsel %vm96, 1, 0
    %vm207 = vcmp.eq.s32.totalorder %v206, 1
    %v208 = vsel %vm207, %v204, 0.0
    %v209 = vsel %vm207, %v205, 0.0
    %v210 = vlaneseq
    %v211 = vshrl.u32 %v210, 7
    %v212 = vsub.s32 4, %v211
    %v213 = vrot.slane %v141, %v212
    %v214 = vmul.f32 %v213, %v208
    %v215 = vmul.f32 %v213, %v209
    %v216 = vadd.f32 %v199, %v214
    %v217 = vadd.f32 %v200, %v215
    %v218 = vlaneseq
    %v219 = vshrl.u32 %v218, 7
    %v220 = vsub.s32 4, %v219
    %v221 = vrot.slane %v72, %v220
    %v222 = vadd.f32 %v216, %v221
    %v223 = vadd.f32 %v217, %v221
    %v224 = vld [vmem:[%s4] sm:$0xff]
    %v225 = vld [vmem:[%s4 + $0x8] sm:$0xff]
    %v226 = vld [vmem:[%s4 + $0x10] sm:$0xff]
    %v227 = vld [vmem:[%s4 + $0x18] sm:$0xff]
    %v228 = vlaneseq
    %v229 = vshrl.u32 %v228, 7
    %v230 = vsub.s32 6, %v229
    %v231 = vrot.slane %v72, %v230
    %v233 = vsel %vm97, %v222, 0
    %v236 = vsel %vm97, %v223, 0
    %238 = vmatprep.subr.mxu0 0.0
    %239 = vmatpush1.msra.mxu0 0.0
    %240 = vmatprep.subr.mxu0 0.0
    %241 = vmatpush1.msra.mxu0 0.0
    %242 = vmatprep.subr.mxu0 0.0
    %243 = vmatpush1.msra.mxu0 0.0
    %244 = vmatprep.subr.mxu0 0.0
    %245 = vmatpush1.msra.mxu0 0.0
    %246 = vmatprep.subr.mxu0 0.0
    %247 = vmatpush1.msra.mxu0 0.0
    %248 = vmatprep.subr.mxu0 0.0
    %249 = vmatpush1.msra.mxu0 0.0
    %250 = vmatprep.subr.mxu0 0.0
    %251 = vmatpush1.msra.mxu0 0.0
    %252 = vmatprep.subr.mxu0 0.0
    %253 = vmatpush1.msra.mxu0 0.0
    %254 = vmatprep.subr.mxu0 0.0
    %255 = vmatpush1.msra.mxu0 0.0
    %256 = vmatprep.subr.mxu0 0.0
    %257 = vmatpush1.msra.mxu0 0.0
    %258 = vmatprep.subr.mxu0 0.0
    %259 = vmatpush1.msra.mxu0 0.0
    %260 = vmatprep.subr.mxu0 0.0
    %261 = vmatpush1.msra.mxu0 0.0
    %262 = vmatprep.subr.mxu0 0.0
    %263 = vmatpush1.msra.mxu0 %v227
    %264 = vmatprep.subr.mxu0 0.0
    %265 = vmatpush1.msra.mxu0 %v226
    %266 = vmatprep.subr.mxu0 0.0
    %267 = vmatpush1.msra.mxu0 %v225
    %268 = vmatprep.subr.mxu0 0.0
    %269 = vmatpush1.msra.mxu0 %v224
    %270 = vmatprep.subr.mxu0 0.0
    %271 = vmatpush2.msra.mxu0 0.0
    %272 = vmatprep.subr.mxu0 0.0
    %273 = vmatpush2.msra.mxu0 0.0
    %274 = vmatprep.subr.mxu0 0.0
    %275 = vmatpush2.msra.mxu0 0.0
    %276 = vmatprep.subr.mxu0 0.0
    %277 = vmatpush2.msra.mxu0 0.0
    %278 = vmatprep.subr.mxu0 0.0
    %279 = vmatpush2.msra.mxu0 0.0
    %280 = vmatprep.subr.mxu0 0.0
    %281 = vmatpush2.msra.mxu0 0.0
    %282 = vmatprep.subr.mxu0 0.0
    %283 = vmatpush2.msra.mxu0 0.0
    %284 = vmatprep.subr.mxu0 0.0
    %285 = vmatpush2.msra.mxu0 0.0
    %286 = vmatprep.subr.mxu0 0.0
    %287 = vmatpush2.msra.mxu0 0.0
    %288 = vmatprep.subr.mxu0 0.0
    %289 = vmatpush2.msra.mxu0 0.0
    %290 = vmatprep.subr.mxu0 0.0
    %291 = vmatpush2.msra.mxu0 0.0
    %292 = vmatprep.subr.mxu0 0.0
    %293 = vmatpush2.msra.mxu0 0.0
    %294 = vmatprep.subr.mxu0 0.0
    %295 = vmatpush2.msra.mxu0 0.0
    %296 = vmatprep.subr.mxu0 0.0
    %297 = vmatpush2.msra.mxu0 0.0
    %298 = vmatprep.subr.mxu0 0.0
    %299 = vmatpush2.msra.mxu0 0.0
    %300 = vmatprep.subr.mxu0 0.0
    %301 = vmatpush2.msra.mxu0 0.0
    %302 = vmatprep.mubr.f32.mxu0 0.0
    %303 = vmatmul.mubr.f32.gmra.mxu0 %v233
    %v304 = vpop.f32.mrf.mxu0
    %v305 = vadd.f32 %v231, %v304
    %v306 = vpop.f32.mrf.mxu0
    %307 = vmatprep.mubr.f32.mxu0 0.0
    %308 = vmatmul.mubr.f32.gmra.mxu0 %v236
    %v309 = vpop.f32.mrf.mxu0
    %v310 = vadd.f32 %v231, %v309
    %v311 = vpop.f32.mrf.mxu0
    %312 = vdwg.mxu0
    %v313 = vadd.f32 %v305, %v77
    %v314 = vadd.f32 %v310, %v78
    %v315 = vsel %vm97, %v313, 0.0
    %316 = vadd.xlane.f32.xlu0 %v315
    %v317 = vpop.xlane.xlu0 %316
    %v318 = vsel %vm97, %v314, 0.0
    %319 = vadd.xlane.f32.xlu0 %v318
    %v320 = vpop.xlane.xlu0 %319
    %v321 = vmul.f32 %v317, %v104
    %v322 = vmul.f32 %v320, %v104
    %v323 = vmul.f32 %v313, %v313
    %v324 = vmul.f32 %v314, %v314
    %v325 = vsel %vm97, %v323, 0.0
    %326 = vadd.xlane.f32.xlu0 %v325
    %v327 = vpop.xlane.xlu0 %326
    %v328 = vsel %vm97, %v324, 0.0
    %329 = vadd.xlane.f32.xlu0 %v328
    %v330 = vpop.xlane.xlu0 %329
    %v331 = vmul.f32 %v327, %v104
    %v332 = vmul.f32 %v330, %v104
    %v333 = vmul.f32 %v321, %v321
    %v334 = vmul.f32 %v322, %v322
    %v335 = vsub.f32 %v331, %v333
    %v336 = vsub.f32 %v332, %v334
    %v337 = vsub.f32 %v313, %v321
    %v338 = vsub.f32 %v314, %v322
    %v339 = vadd.f32 %v335, 1e-05
    %v340 = vadd.f32 %v336, 1e-05
    %v341 = vrsqrt.pop %v339
    %v342 = vrsqrt.pop %v340
    %v343 = vmul.f32 %v337, %v341
    %v344 = vmul.f32 %v338, %v342
    %v345 = vlaneseq
    %v346 = vshrl.u32 %v345, 7
    %v347 = vsub.s32 2, %v346
    %v348 = vrot.slane %v72, %v347
    %v349 = vmul.f32 %v343, %v348
    %v350 = vmul.f32 %v344, %v348
    %v351 = vlaneseq
    %v352 = vshrl.u32 %v351, 7
    %v353 = vsub.s32 3, %v352
    %v354 = vrot.slane %v72, %v353
    %v355 = vadd.f32 %v349, %v354
    %v356 = vadd.f32 %v350, %v354
    %s357 = scalar_lea.vmem %s3, 8
    %v358 = vld [vmem:[%s357] sm:$0x1f]
    %v359 = vrot.slane %v355, 6
    %v360 = vrot.slane %v356, 6
    %v361 = vsel %vm144, %v359, %v360
    %v362 = vsel %vm144, %v360, %v359
    %v363 = vsel %vm148, %v362, 0.0
    %v364 = vsel %vm148, %v361, 0.0
    %v365 = vlaneseq
    %v366 = vshrl.u32 %v365, 7
    %v367 = vsub.s32 0, %v366
    %v368 = vrot.slane %v358, %v367
    %v369 = vmul.f32 %v368, %v363
    %v370 = vmul.f32 %v368, %v364
    %v371 = vadd.f32 %v369, 0.0
    %v372 = vadd.f32 %v370, 0.0
    %v373 = vrot.slane %v355, 7
    %v374 = vrot.slane %v356, 7
    %v375 = vsel %vm161, %v373, %v374
    %v376 = vsel %vm161, %v374, %v373
    %v377 = vsel %vm165, %v376, 0.0
    %v378 = vsel %vm165, %v375, 0.0
    %v379 = vlaneseq
    %v380 = vshrl.u32 %v379, 7
    %v381 = vsub.s32 1, %v380
    %v382 = vrot.slane %v358, %v381
    %v383 = vmul.f32 %v382, %v377
    %v384 = vmul.f32 %v382, %v378
    %v385 = vadd.f32 %v371, %v383
    %v386 = vadd.f32 %v372, %v384
    %v387 = vlaneseq
    %v388 = vshrl.u32 %v387, 7
    %v389 = vsub.s32 2, %v388
    %v390 = vrot.slane %v358, %v389
    %v391 = vmul.f32 %v390, %v355
    %v392 = vmul.f32 %v390, %v356
    %v393 = vadd.f32 %v385, %v391
    %v394 = vadd.f32 %v386, %v392
    %v395 = vrot.slane %v355, 1
    %v396 = vrot.slane %v356, 1
    %v397 = vsel %vm186, %v395, %v396
    %v398 = vsel %vm186, %v396, %v395
    %v399 = vsel %vm190, %v397, 0.0
    %v400 = vsel %vm190, %v398, 0.0
    %v401 = vlaneseq
    %v402 = vshrl.u32 %v401, 7
    %v403 = vsub.s32 3, %v402
    %v404 = vrot.slane %v358, %v403
    %v405 = vmul.f32 %v404, %v399
    %v406 = vmul.f32 %v404, %v400
    %v407 = vadd.f32 %v393, %v405
    %v408 = vadd.f32 %v394, %v406
    %v409 = vrot.slane %v355, 2
    %v410 = vrot.slane %v356, 2
    %v411 = vsel %vm203, %v409, %v410
    %v412 = vsel %vm203, %v410, %v409
    %v413 = vsel %vm207, %v411, 0.0
    %v414 = vsel %vm207, %v412, 0.0
    %v415 = vlaneseq
    %v416 = vshrl.u32 %v415, 7
    %v417 = vsub.s32 4, %v416
    %v418 = vrot.slane %v358, %v417
    %v419 = vmul.f32 %v418, %v413
    %v420 = vmul.f32 %v418, %v414
    %v421 = vadd.f32 %v407, %v419
    %v422 = vadd.f32 %v408, %v420
    %v423 = vlaneseq
    %v424 = vshrl.u32 %v423, 7
    %v425 = vsub.s32 5, %v424
    %v426 = vrot.slane %v72, %v425
    %v427 = vadd.f32 %v421, %v426
    %v428 = vadd.f32 %v422, %v426
    %s429 = scalar_lea.vmem %s4, 32
    %v430 = vld [vmem:[%s429] sm:$0xff]
    %v431 = vld [vmem:[%s429 + $0x8] sm:$0xff]
    %v432 = vld [vmem:[%s429 + $0x10] sm:$0xff]
    %v433 = vld [vmem:[%s429 + $0x18] sm:$0xff]
    %v434 = vlaneseq
    %v435 = vshrl.u32 %v434, 7
    %v436 = vsub.s32 7, %v435
    %v437 = vrot.slane %v72, %v436
    %v439 = vsel %vm97, %v427, 0
    %v442 = vsel %vm97, %v428, 0
    %444 = vmatprep.subr.mxu0 0.0
    %445 = vmatpush1.msra.mxu0 0.0
    %446 = vmatprep.subr.mxu0 0.0
    %447 = vmatpush1.msra.mxu0 0.0
    %448 = vmatprep.subr.mxu0 0.0
    %449 = vmatpush1.msra.mxu0 0.0
    %450 = vmatprep.subr.mxu0 0.0
    %451 = vmatpush1.msra.mxu0 0.0
    %452 = vmatprep.subr.mxu0 0.0
    %453 = vmatpush1.msra.mxu0 0.0
    %454 = vmatprep.subr.mxu0 0.0
    %455 = vmatpush1.msra.mxu0 0.0
    %456 = vmatprep.subr.mxu0 0.0
    %457 = vmatpush1.msra.mxu0 0.0
    %458 = vmatprep.subr.mxu0 0.0
    %459 = vmatpush1.msra.mxu0 0.0
    %460 = vmatprep.subr.mxu0 0.0
    %461 = vmatpush1.msra.mxu0 0.0
    %462 = vmatprep.subr.mxu0 0.0
    %463 = vmatpush1.msra.mxu0 0.0
    %464 = vmatprep.subr.mxu0 0.0
    %465 = vmatpush1.msra.mxu0 0.0
    %466 = vmatprep.subr.mxu0 0.0
    %467 = vmatpush1.msra.mxu0 0.0
    %468 = vmatprep.subr.mxu0 0.0
    %469 = vmatpush1.msra.mxu0 %v433
    %470 = vmatprep.subr.mxu0 0.0
    %471 = vmatpush1.msra.mxu0 %v432
    %472 = vmatprep.subr.mxu0 0.0
    %473 = vmatpush1.msra.mxu0 %v431
    %474 = vmatprep.subr.mxu0 0.0
    %475 = vmatpush1.msra.mxu0 %v430
    %476 = vmatprep.subr.mxu0 0.0
    %477 = vmatpush2.msra.mxu0 0.0
    %478 = vmatprep.subr.mxu0 0.0
    %479 = vmatpush2.msra.mxu0 0.0
    %480 = vmatprep.subr.mxu0 0.0
    %481 = vmatpush2.msra.mxu0 0.0
    %482 = vmatprep.subr.mxu0 0.0
    %483 = vmatpush2.msra.mxu0 0.0
    %484 = vmatprep.subr.mxu0 0.0
    %485 = vmatpush2.msra.mxu0 0.0
    %486 = vmatprep.subr.mxu0 0.0
    %487 = vmatpush2.msra.mxu0 0.0
    %488 = vmatprep.subr.mxu0 0.0
    %489 = vmatpush2.msra.mxu0 0.0
    %490 = vmatprep.subr.mxu0 0.0
    %491 = vmatpush2.msra.mxu0 0.0
    %492 = vmatprep.subr.mxu0 0.0
    %493 = vmatpush2.msra.mxu0 0.0
    %494 = vmatprep.subr.mxu0 0.0
    %495 = vmatpush2.msra.mxu0 0.0
    %496 = vmatprep.subr.mxu0 0.0
    %497 = vmatpush2.msra.mxu0 0.0
    %498 = vmatprep.subr.mxu0 0.0
    %499 = vmatpush2.msra.mxu0 0.0
    %500 = vmatprep.subr.mxu0 0.0
    %501 = vmatpush2.msra.mxu0 0.0
    %502 = vmatprep.subr.mxu0 0.0
    %503 = vmatpush2.msra.mxu0 0.0
    %504 = vmatprep.subr.mxu0 0.0
    %505 = vmatpush2.msra.mxu0 0.0
    %506 = vmatprep.subr.mxu0 0.0
    %507 = vmatpush2.msra.mxu0 0.0
    %508 = vmatprep.mubr.f32.mxu0 0.0
    %509 = vmatmul.mubr.f32.gmra.mxu0 %v439
    %v510 = vpop.f32.mrf.mxu0
    %v511 = vadd.f32 %v437, %v510
    %v512 = vpop.f32.mrf.mxu0
    %513 = vmatprep.mubr.f32.mxu0 0.0
    %514 = vmatmul.mubr.f32.gmra.mxu0 %v442
    %v515 = vpop.f32.mrf.mxu0
    %v516 = vadd.f32 %v437, %v515
    %v517 = vpop.f32.mrf.mxu0
    %518 = vdwg.mxu0
    %v519 = vadd.f32 %v511, %v313
    %v520 = vadd.f32 %v516, %v314
    %v521 = vsel %vm97, %v519, 0.0
    %522 = vadd.xlane.f32.xlu0 %v521
    %v523 = vpop.xlane.xlu0 %522
    %v524 = vsel %vm97, %v520, 0.0
    %525 = vadd.xlane.f32.xlu0 %v524
    %v526 = vpop.xlane.xlu0 %525
    %v527 = vmul.f32 %v523, %v104
    %v528 = vmul.f32 %v526, %v104
    %v529 = vmul.f32 %v519, %v519
    %v530 = vmul.f32 %v520, %v520
    %v531 = vsel %vm97, %v529, 0.0
    %532 = vadd.xlane.f32.xlu0 %v531
    %v533 = vpop.xlane.xlu0 %532
    %v534 = vsel %vm97, %v530, 0.0
    %535 = vadd.xlane.f32.xlu0 %v534
    %v536 = vpop.xlane.xlu0 %535
    %v537 = vmul.f32 %v533, %v104
    %v538 = vmul.f32 %v536, %v104
    %v539 = vmul.f32 %v527, %v527
    %v540 = vmul.f32 %v528, %v528
    %v541 = vsub.f32 %v537, %v539
    %v542 = vsub.f32 %v538, %v540
    %v543 = vsub.f32 %v519, %v527
    %v544 = vsub.f32 %v520, %v528
    %v545 = vadd.f32 %v541, 1e-05
    %v546 = vadd.f32 %v542, 1e-05
    %v547 = vrsqrt.pop %v545
    %v548 = vrsqrt.pop %v546
    %v549 = vmul.f32 %v543, %v547
    %v550 = vmul.f32 %v544, %v548
    %v551 = vlaneseq
    %v552 = vshrl.u32 %v551, 7
    %v553 = vsub.s32 0, %v552
    %v554 = vrot.slane %v73, %v553
    %v555 = vmul.f32 %v549, %v554
    %v556 = vmul.f32 %v550, %v554
    %v557 = vlaneseq
    %v558 = vshrl.u32 %v557, 7
    %v559 = vsub.s32 1, %v558
    %v560 = vrot.slane %v73, %v559
    %v561 = vadd.f32 %v555, %v560
    %v562 = vadd.f32 %v556, %v560
    %v563 = vld [vmem:[%s5] sm:$0xff]
    %v564 = vld [vmem:[%s5 + $0x8] sm:$0xff]
    %v565 = vld [vmem:[%s5 + $0x10] sm:$0xff]
    %v566 = vld [vmem:[%s5 + $0x18] sm:$0xff]
    %v567 = vld [vmem:[%s5 + $0x20] sm:$0xff]
    %v568 = vld [vmem:[%s5 + $0x28] sm:$0xff]
    %v569 = vld [vmem:[%s5 + $0x30] sm:$0xff]
    %v570 = vld [vmem:[%s5 + $0x38] sm:$0xff]
    %v571 = vld [vmem:[%s5 + $0x40] sm:$0xff]
    %v572 = vld [vmem:[%s5 + $0x48] sm:$0xff]
    %v573 = vld [vmem:[%s5 + $0x50] sm:$0xff]
    %v574 = vld [vmem:[%s5 + $0x58] sm:$0xff]
    %v575 = vld [vmem:[%s6] sm:$0x7]
    %v577 = vlaneseq
    %v578 = vshrl.u32 %v577, 7
    %v579 = vsub.s32 0, %v578
    %v580 = vrot.slane %v575, %v579
    %v581 = vlaneseq
    %v582 = vshrl.u32 %v581, 7
    %v583 = vsub.s32 1, %v582
    %v584 = vrot.slane %v575, %v583
    %v585 = vlaneseq
    %v586 = vshrl.u32 %v585, 7
    %v587 = vsub.s32 2, %v586
    %v588 = vrot.slane %v575, %v587
    %v593 = vsel %vm97, %v561, 0
    %v596 = vsel %vm97, %v562, 0
    %598 = vmatprep.subr.mxu0 0.0
    %599 = vmatpush1.msra.mxu0 0.0
    %600 = vmatprep.subr.mxu0 0.0
    %601 = vmatpush1.msra.mxu0 0.0
    %602 = vmatprep.subr.mxu0 0.0
    %603 = vmatpush1.msra.mxu0 0.0
    %604 = vmatprep.subr.mxu0 0.0
    %605 = vmatpush1.msra.mxu0 0.0
    %606 = vmatprep.subr.mxu0 0.0
    %607 = vmatpush1.msra.mxu0 0.0
    %608 = vmatprep.subr.mxu0 0.0
    %609 = vmatpush1.msra.mxu0 0.0
    %610 = vmatprep.subr.mxu0 0.0
    %611 = vmatpush1.msra.mxu0 0.0
    %612 = vmatprep.subr.mxu0 0.0
    %613 = vmatpush1.msra.mxu0 0.0
    %614 = vmatprep.subr.mxu0 0.0
    %615 = vmatpush1.msra.mxu0 0.0
    %616 = vmatprep.subr.mxu0 0.0
    %617 = vmatpush1.msra.mxu0 0.0
    %618 = vmatprep.subr.mxu0 0.0
    %619 = vmatpush1.msra.mxu0 0.0
    %620 = vmatprep.subr.mxu0 0.0
    %621 = vmatpush1.msra.mxu0 0.0
    %622 = vmatprep.subr.mxu0 %v573
    %623 = vmatpush1.msra.mxu0 %v572
    %624 = vmatprep.subr.mxu0 %v570
    %625 = vmatpush1.msra.mxu0 %v569
    %626 = vmatprep.subr.mxu0 %v567
    %627 = vmatpush1.msra.mxu0 %v566
    %628 = vmatprep.subr.mxu0 %v564
    %629 = vmatpush1.msra.mxu0 %v563
    %630 = vmatprep.subr.mxu0 0.0
    %631 = vmatpush2.msra.mxu0 0.0
    %632 = vmatprep.subr.mxu0 0.0
    %633 = vmatpush2.msra.mxu0 0.0
    %634 = vmatprep.subr.mxu0 0.0
    %635 = vmatpush2.msra.mxu0 0.0
    %636 = vmatprep.subr.mxu0 0.0
    %637 = vmatpush2.msra.mxu0 0.0
    %638 = vmatprep.subr.mxu0 0.0
    %639 = vmatpush2.msra.mxu0 0.0
    %640 = vmatprep.subr.mxu0 0.0
    %641 = vmatpush2.msra.mxu0 0.0
    %642 = vmatprep.subr.mxu0 0.0
    %643 = vmatpush2.msra.mxu0 0.0
    %644 = vmatprep.subr.mxu0 0.0
    %645 = vmatpush2.msra.mxu0 0.0
    %646 = vmatprep.subr.mxu0 0.0
    %647 = vmatpush2.msra.mxu0 0.0
    %648 = vmatprep.subr.mxu0 0.0
    %649 = vmatpush2.msra.mxu0 0.0
    %650 = vmatprep.subr.mxu0 0.0
    %651 = vmatpush2.msra.mxu0 0.0
    %652 = vmatprep.subr.mxu0 0.0
    %653 = vmatpush2.msra.mxu0 0.0
    %654 = vmatprep.subr.mxu0 0.0
    %655 = vmatpush2.msra.mxu0 0.0
    %656 = vmatprep.subr.mxu0 0.0
    %657 = vmatpush2.msra.mxu0 0.0
    %658 = vmatprep.subr.mxu0 0.0
    %659 = vmatpush2.msra.mxu0 0.0
    %660 = vmatprep.subr.mxu0 0.0
    %661 = vmatpush2.msra.mxu0 0.0
    %662 = vmatprep.mubr.f32.mxu0 0.0
    %663 = vmatmul.mubr.f32.gmra.mxu0 %v593
    %v664 = vpop.f32.mrf.mxu0
    %v665 = vadd.f32 %v580, %v664
    %v666 = vpop.f32.mrf.mxu0
    %v667 = vadd.f32 %v584, %v666
    %668 = vmatprep.mubr.f32.mxu0 0.0
    %669 = vmatmul.mubr.f32.gmra.mxu0 %v596
    %v670 = vpop.f32.mrf.mxu0
    %v671 = vadd.f32 %v580, %v670
    %v672 = vpop.f32.mrf.mxu0
    %v673 = vadd.f32 %v584, %v672
    %674 = vdwg.mxu0
    %675 = vmatprep.subr.mxu0 0.0
    %676 = vmatpush1.msra.mxu0 0.0
    %677 = vmatprep.subr.mxu0 0.0
    %678 = vmatpush1.msra.mxu0 0.0
    %679 = vmatprep.subr.mxu0 0.0
    %680 = vmatpush1.msra.mxu0 0.0
    %681 = vmatprep.subr.mxu0 0.0
    %682 = vmatpush1.msra.mxu0 0.0
    %683 = vmatprep.subr.mxu0 0.0
    %684 = vmatpush1.msra.mxu0 0.0
    %685 = vmatprep.subr.mxu0 0.0
    %686 = vmatpush1.msra.mxu0 0.0
    %687 = vmatprep.subr.mxu0 0.0
    %688 = vmatpush1.msra.mxu0 0.0
    %689 = vmatprep.subr.mxu0 0.0
    %690 = vmatpush1.msra.mxu0 0.0
    %691 = vmatprep.subr.mxu0 0.0
    %692 = vmatpush1.msra.mxu0 0.0
    %693 = vmatprep.subr.mxu0 0.0
    %694 = vmatpush1.msra.mxu0 0.0
    %695 = vmatprep.subr.mxu0 0.0
    %696 = vmatpush1.msra.mxu0 0.0
    %697 = vmatprep.subr.mxu0 0.0
    %698 = vmatpush1.msra.mxu0 0.0
    %699 = vmatprep.subr.mxu0 0.0
    %700 = vmatpush1.msra.mxu0 %v574
    %701 = vmatprep.subr.mxu0 0.0
    %702 = vmatpush1.msra.mxu0 %v571
    %703 = vmatprep.subr.mxu0 0.0
    %704 = vmatpush1.msra.mxu0 %v568
    %705 = vmatprep.subr.mxu0 0.0
    %706 = vmatpush1.msra.mxu0 %v565
    %707 = vmatprep.subr.mxu0 0.0
    %708 = vmatpush2.msra.mxu0 0.0
    %709 = vmatprep.subr.mxu0 0.0
    %710 = vmatpush2.msra.mxu0 0.0
    %711 = vmatprep.subr.mxu0 0.0
    %712 = vmatpush2.msra.mxu0 0.0
    %713 = vmatprep.subr.mxu0 0.0
    %714 = vmatpush2.msra.mxu0 0.0
    %715 = vmatprep.subr.mxu0 0.0
    %716 = vmatpush2.msra.mxu0 0.0
    %717 = vmatprep.subr.mxu0 0.0
    %718 = vmatpush2.msra.mxu0 0.0
    %719 = vmatprep.subr.mxu0 0.0
    %720 = vmatpush2.msra.mxu0 0.0
    %721 = vmatprep.subr.mxu0 0.0
    %722 = vmatpush2.msra.mxu0 0.0
    %723 = vmatprep.subr.mxu0 0.0
    %724 = vmatpush2.msra.mxu0 0.0
    %725 = vmatprep.subr.mxu0 0.0
    %726 = vmatpush2.msra.mxu0 0.0
    %727 = vmatprep.subr.mxu0 0.0
    %728 = vmatpush2.msra.mxu0 0.0
    %729 = vmatprep.subr.mxu0 0.0
    %730 = vmatpush2.msra.mxu0 0.0
    %731 = vmatprep.subr.mxu0 0.0
    %732 = vmatpush2.msra.mxu0 0.0
    %733 = vmatprep.subr.mxu0 0.0
    %734 = vmatpush2.msra.mxu0 0.0
    %735 = vmatprep.subr.mxu0 0.0
    %736 = vmatpush2.msra.mxu0 0.0
    %737 = vmatprep.subr.mxu0 0.0
    %738 = vmatpush2.msra.mxu0 0.0
    %739 = vmatprep.mubr.f32.mxu0 0.0
    %740 = vmatmul.mubr.f32.gmra.mxu0 %v593
    %v741 = vpop.f32.mrf.mxu0
    %v742 = vadd.f32 %v588, %v741
    %v743 = vpop.f32.mrf.mxu0
    %744 = vmatprep.mubr.f32.mxu0 0.0
    %745 = vmatmul.mubr.f32.gmra.mxu0 %v596
    %v746 = vpop.f32.mrf.mxu0
    %v747 = vadd.f32 %v588, %v746
    %v748 = vpop.f32.mrf.mxu0
    %749 = vdwg.mxu0
    %750 = vmatprep.subr.mxu0 0.0
    %751 = vmatpush1.xpose.msra.mxu0 0.0
    %752 = vmatprep.subr.mxu0 0.0
    %753 = vmatpush1.xpose.msra.mxu0 0.0
    %754 = vmatprep.subr.mxu0 0.0
    %755 = vmatpush1.xpose.msra.mxu0 0.0
    %756 = vmatprep.subr.mxu0 0.0
    %757 = vmatpush1.xpose.msra.mxu0 0.0
    %758 = vmatprep.subr.mxu0 0.0
    %759 = vmatpush1.xpose.msra.mxu0 0.0
    %760 = vmatprep.subr.mxu0 0.0
    %761 = vmatpush1.xpose.msra.mxu0 0.0
    %762 = vmatprep.subr.mxu0 0.0
    %763 = vmatpush1.xpose.msra.mxu0 0.0
    %764 = vmatprep.subr.mxu0 0.0
    %765 = vmatpush1.xpose.msra.mxu0 0.0
    %766 = vmatprep.subr.mxu0 0.0
    %767 = vmatpush1.xpose.msra.mxu0 0.0
    %768 = vmatprep.subr.mxu0 0.0
    %769 = vmatpush1.xpose.msra.mxu0 0.0
    %770 = vmatprep.subr.mxu0 0.0
    %771 = vmatpush1.xpose.msra.mxu0 0.0
    %772 = vmatprep.subr.mxu0 0.0
    %773 = vmatpush1.xpose.msra.mxu0 0.0
    %774 = vmatprep.subr.mxu0 0.0
    %775 = vmatpush1.xpose.msra.mxu0 0.0
    %776 = vmatprep.subr.mxu0 0.0
    %777 = vmatpush1.xpose.msra.mxu0 0.0
    %778 = vmatprep.subr.mxu0 0.0
    %779 = vmatpush1.xpose.msra.mxu0 0.0
    %780 = vmatprep.subr.mxu0 0.0
    %781 = vmatpush1.xpose.msra.mxu0 %v667
    %782 = vmatprep.subr.mxu0 0.0
    %783 = vmatpush2.xpose.msra.mxu0 0.0
    %784 = vmatprep.subr.mxu0 0.0
    %785 = vmatpush2.xpose.msra.mxu0 0.0
    %786 = vmatprep.subr.mxu0 0.0
    %787 = vmatpush2.xpose.msra.mxu0 0.0
    %788 = vmatprep.subr.mxu0 0.0
    %789 = vmatpush2.xpose.msra.mxu0 0.0
    %790 = vmatprep.subr.mxu0 0.0
    %791 = vmatpush2.xpose.msra.mxu0 0.0
    %792 = vmatprep.subr.mxu0 0.0
    %793 = vmatpush2.xpose.msra.mxu0 0.0
    %794 = vmatprep.subr.mxu0 0.0
    %795 = vmatpush2.xpose.msra.mxu0 0.0
    %796 = vmatprep.subr.mxu0 0.0
    %797 = vmatpush2.xpose.msra.mxu0 0.0
    %798 = vmatprep.subr.mxu0 0.0
    %799 = vmatpush2.xpose.msra.mxu0 0.0
    %800 = vmatprep.subr.mxu0 0.0
    %801 = vmatpush2.xpose.msra.mxu0 0.0
    %802 = vmatprep.subr.mxu0 0.0
    %803 = vmatpush2.xpose.msra.mxu0 0.0
    %804 = vmatprep.subr.mxu0 0.0
    %805 = vmatpush2.xpose.msra.mxu0 0.0
    %806 = vmatprep.subr.mxu0 0.0
    %807 = vmatpush2.xpose.msra.mxu0 0.0
    %808 = vmatprep.subr.mxu0 0.0
    %809 = vmatpush2.xpose.msra.mxu0 0.0
    %810 = vmatprep.subr.mxu0 0.0
    %811 = vmatpush2.xpose.msra.mxu0 0.0
    %812 = vmatprep.subr.mxu0 0.0
    %813 = vmatpush2.xpose.msra.mxu0 0.0
    %814 = vmatprep.mubr.f32.mxu0 0.0
    %815 = vmatmul.mubr.f32.gmra.mxu0 %v665
    %v816 = vpop.f32.mrf.mxu0
    %v817 = vadd.f32 0.0, %v816
    %v818 = vpop.f32.mrf.mxu0
    %819 = vdwg.mxu0
    %820 = vmatprep.subr.mxu0 0.0
    %821 = vmatpush1.xpose.msra.mxu0 0.0
    %822 = vmatprep.subr.mxu0 0.0
    %823 = vmatpush1.xpose.msra.mxu0 0.0
    %824 = vmatprep.subr.mxu0 0.0
    %825 = vmatpush1.xpose.msra.mxu0 0.0
    %826 = vmatprep.subr.mxu0 0.0
    %827 = vmatpush1.xpose.msra.mxu0 0.0
    %828 = vmatprep.subr.mxu0 0.0
    %829 = vmatpush1.xpose.msra.mxu0 0.0
    %830 = vmatprep.subr.mxu0 0.0
    %831 = vmatpush1.xpose.msra.mxu0 0.0
    %832 = vmatprep.subr.mxu0 0.0
    %833 = vmatpush1.xpose.msra.mxu0 0.0
    %834 = vmatprep.subr.mxu0 0.0
    %835 = vmatpush1.xpose.msra.mxu0 0.0
    %836 = vmatprep.subr.mxu0 0.0
    %837 = vmatpush1.xpose.msra.mxu0 0.0
    %838 = vmatprep.subr.mxu0 0.0
    %839 = vmatpush1.xpose.msra.mxu0 0.0
    %840 = vmatprep.subr.mxu0 0.0
    %841 = vmatpush1.xpose.msra.mxu0 0.0
    %842 = vmatprep.subr.mxu0 0.0
    %843 = vmatpush1.xpose.msra.mxu0 0.0
    %844 = vmatprep.subr.mxu0 0.0
    %845 = vmatpush1.xpose.msra.mxu0 0.0
    %846 = vmatprep.subr.mxu0 0.0
    %847 = vmatpush1.xpose.msra.mxu0 0.0
    %848 = vmatprep.subr.mxu0 0.0
    %849 = vmatpush1.xpose.msra.mxu0 0.0
    %850 = vmatprep.subr.mxu0 0.0
    %851 = vmatpush1.xpose.msra.mxu0 %v673
    %852 = vmatprep.subr.mxu0 0.0
    %853 = vmatpush2.xpose.msra.mxu0 0.0
    %854 = vmatprep.subr.mxu0 0.0
    %855 = vmatpush2.xpose.msra.mxu0 0.0
    %856 = vmatprep.subr.mxu0 0.0
    %857 = vmatpush2.xpose.msra.mxu0 0.0
    %858 = vmatprep.subr.mxu0 0.0
    %859 = vmatpush2.xpose.msra.mxu0 0.0
    %860 = vmatprep.subr.mxu0 0.0
    %861 = vmatpush2.xpose.msra.mxu0 0.0
    %862 = vmatprep.subr.mxu0 0.0
    %863 = vmatpush2.xpose.msra.mxu0 0.0
    %864 = vmatprep.subr.mxu0 0.0
    %865 = vmatpush2.xpose.msra.mxu0 0.0
    %866 = vmatprep.subr.mxu0 0.0
    %867 = vmatpush2.xpose.msra.mxu0 0.0
    %868 = vmatprep.subr.mxu0 0.0
    %869 = vmatpush2.xpose.msra.mxu0 0.0
    %870 = vmatprep.subr.mxu0 0.0
    %871 = vmatpush2.xpose.msra.mxu0 0.0
    %872 = vmatprep.subr.mxu0 0.0
    %873 = vmatpush2.xpose.msra.mxu0 0.0
    %874 = vmatprep.subr.mxu0 0.0
    %875 = vmatpush2.xpose.msra.mxu0 0.0
    %876 = vmatprep.subr.mxu0 0.0
    %877 = vmatpush2.xpose.msra.mxu0 0.0
    %878 = vmatprep.subr.mxu0 0.0
    %879 = vmatpush2.xpose.msra.mxu0 0.0
    %880 = vmatprep.subr.mxu0 0.0
    %881 = vmatpush2.xpose.msra.mxu0 0.0
    %882 = vmatprep.subr.mxu0 0.0
    %883 = vmatpush2.xpose.msra.mxu0 0.0
    %884 = vmatprep.mubr.f32.mxu0 0.0
    %885 = vmatmul.mubr.f32.gmra.mxu0 %v671
    %v886 = vpop.f32.mrf.mxu0
    %v887 = vadd.f32 0.0, %v886
    %v888 = vpop.f32.mrf.mxu0
    %889 = vdwg.mxu0
    %vm890 = vcmask 64512
    %v891 = vsel %vm890, %v817, -inf
    %892 = vmax.xlane.f32.xlu0 %v891
    %v893 = vpop.xlane.xlu0 %892
    %v894 = vsel %vm890, %v887, -inf
    %895 = vmax.xlane.f32.xlu0 %v894
    %v896 = vpop.xlane.xlu0 %895
    %v897 = vsub.f32 %v817, %v893
    %v898 = vsub.f32 %v887, %v896
    %v899 = vmul.f32 %v897, 1.442695
    %v900 = vpow.pop %v899
    %v901 = vmul.f32 %v898, 1.442695
    %v902 = vpow.pop %v901
    %v903 = vsel %vm890, %v900, 0.0
    %904 = vadd.xlane.f32.xlu0 %v903
    %v905 = vpop.xlane.xlu0 %904
    %v906 = vsel %vm890, %v902, 0.0
    %907 = vadd.xlane.f32.xlu0 %v906
    %v908 = vpop.xlane.xlu0 %907
    %v909 = vrcp.pop %v905
    %v910 = vrcp.pop %v908
    %v911 = vmul.f32 %v900, %v909
    %v912 = vmul.f32 %v902, %v910
    %v914 = vsel %vm890, %v911, 0
    %916 = vmatprep.subr.mxu0 0.0
    %917 = vmatpush1.msra.mxu0 0.0
    %918 = vmatprep.subr.mxu0 0.0
    %919 = vmatpush1.msra.mxu0 0.0
    %920 = vmatprep.subr.mxu0 0.0
    %921 = vmatpush1.msra.mxu0 0.0
    %922 = vmatprep.subr.mxu0 0.0
    %923 = vmatpush1.msra.mxu0 0.0
    %924 = vmatprep.subr.mxu0 0.0
    %925 = vmatpush1.msra.mxu0 0.0
    %926 = vmatprep.subr.mxu0 0.0
    %927 = vmatpush1.msra.mxu0 0.0
    %928 = vmatprep.subr.mxu0 0.0
    %929 = vmatpush1.msra.mxu0 0.0
    %930 = vmatprep.subr.mxu0 0.0
    %931 = vmatpush1.msra.mxu0 0.0
    %932 = vmatprep.subr.mxu0 0.0
    %933 = vmatpush1.msra.mxu0 0.0
    %934 = vmatprep.subr.mxu0 0.0
    %935 = vmatpush1.msra.mxu0 0.0
    %936 = vmatprep.subr.mxu0 0.0
    %937 = vmatpush1.msra.mxu0 0.0
    %938 = vmatprep.subr.mxu0 0.0
    %939 = vmatpush1.msra.mxu0 0.0
    %940 = vmatprep.subr.mxu0 0.0
    %941 = vmatpush1.msra.mxu0 0.0
    %942 = vmatprep.subr.mxu0 0.0
    %943 = vmatpush1.msra.mxu0 0.0
    %944 = vmatprep.subr.mxu0 0.0
    %945 = vmatpush1.msra.mxu0 0.0
    %946 = vmatprep.subr.mxu0 0.0
    %947 = vmatpush1.msra.mxu0 %v742
    %948 = vmatprep.subr.mxu0 0.0
    %949 = vmatpush2.msra.mxu0 0.0
    %950 = vmatprep.subr.mxu0 0.0
    %951 = vmatpush2.msra.mxu0 0.0
    %952 = vmatprep.subr.mxu0 0.0
    %953 = vmatpush2.msra.mxu0 0.0
    %954 = vmatprep.subr.mxu0 0.0
    %955 = vmatpush2.msra.mxu0 0.0
    %956 = vmatprep.subr.mxu0 0.0
    %957 = vmatpush2.msra.mxu0 0.0
    %958 = vmatprep.subr.mxu0 0.0
    %959 = vmatpush2.msra.mxu0 0.0
    %960 = vmatprep.subr.mxu0 0.0
    %961 = vmatpush2.msra.mxu0 0.0
    %962 = vmatprep.subr.mxu0 0.0
    %963 = vmatpush2.msra.mxu0 0.0
    %964 = vmatprep.subr.mxu0 0.0
    %965 = vmatpush2.msra.mxu0 0.0
    %966 = vmatprep.subr.mxu0 0.0
    %967 = vmatpush2.msra.mxu0 0.0
    %968 = vmatprep.subr.mxu0 0.0
    %969 = vmatpush2.msra.mxu0 0.0
    %970 = vmatprep.subr.mxu0 0.0
    %971 = vmatpush2.msra.mxu0 0.0
    %972 = vmatprep.subr.mxu0 0.0
    %973 = vmatpush2.msra.mxu0 0.0
    %974 = vmatprep.subr.mxu0 0.0
    %975 = vmatpush2.msra.mxu0 0.0
    %976 = vmatprep.subr.mxu0 0.0
    %977 = vmatpush2.msra.mxu0 0.0
    %978 = vmatprep.subr.mxu0 0.0
    %979 = vmatpush2.msra.mxu0 0.0
    %980 = vmatprep.mubr.f32.mxu0 0.0
    %981 = vmatmul.mubr.f32.gmra.mxu0 %v914
    %v982 = vpop.f32.mrf.mxu0
    %v983 = vadd.f32 0.0, %v982
    %v984 = vpop.f32.mrf.mxu0
    %985 = vdwg.mxu0
    %v987 = vsel %vm890, %v912, 0
    %989 = vmatprep.subr.mxu0 0.0
    %990 = vmatpush1.msra.mxu0 0.0
    %991 = vmatprep.subr.mxu0 0.0
    %992 = vmatpush1.msra.mxu0 0.0
    %993 = vmatprep.subr.mxu0 0.0
    %994 = vmatpush1.msra.mxu0 0.0
    %995 = vmatprep.subr.mxu0 0.0
    %996 = vmatpush1.msra.mxu0 0.0
    %997 = vmatprep.subr.mxu0 0.0
    %998 = vmatpush1.msra.mxu0 0.0
    %999 = vmatprep.subr.mxu0 0.0
    %1000 = vmatpush1.msra.mxu0 0.0
    %1001 = vmatprep.subr.mxu0 0.0
    %1002 = vmatpush1.msra.mxu0 0.0
    %1003 = vmatprep.subr.mxu0 0.0
    %1004 = vmatpush1.msra.mxu0 0.0
    %1005 = vmatprep.subr.mxu0 0.0
    %1006 = vmatpush1.msra.mxu0 0.0
    %1007 = vmatprep.subr.mxu0 0.0
    %1008 = vmatpush1.msra.mxu0 0.0
    %1009 = vmatprep.subr.mxu0 0.0
    %1010 = vmatpush1.msra.mxu0 0.0
    %1011 = vmatprep.subr.mxu0 0.0
    %1012 = vmatpush1.msra.mxu0 0.0
    %1013 = vmatprep.subr.mxu0 0.0
    %1014 = vmatpush1.msra.mxu0 0.0
    %1015 = vmatprep.subr.mxu0 0.0
    %1016 = vmatpush1.msra.mxu0 0.0
    %1017 = vmatprep.subr.mxu0 0.0
    %1018 = vmatpush1.msra.mxu0 0.0
    %1019 = vmatprep.subr.mxu0 0.0
    %1020 = vmatpush1.msra.mxu0 %v747
    %1021 = vmatprep.subr.mxu0 0.0
    %1022 = vmatpush2.msra.mxu0 0.0
    %1023 = vmatprep.subr.mxu0 0.0
    %1024 = vmatpush2.msra.mxu0 0.0
    %1025 = vmatprep.subr.mxu0 0.0
    %1026 = vmatpush2.msra.mxu0 0.0
    %1027 = vmatprep.subr.mxu0 0.0
    %1028 = vmatpush2.msra.mxu0 0.0
    %1029 = vmatprep.subr.mxu0 0.0
    %1030 = vmatpush2.msra.mxu0 0.0
    %1031 = vmatprep.subr.mxu0 0.0
    %1032 = vmatpush2.msra.mxu0 0.0
    %1033 = vmatprep.subr.mxu0 0.0
    %1034 = vmatpush2.msra.mxu0 0.0
    %1035 = vmatprep.subr.mxu0 0.0
    %1036 = vmatpush2.msra.mxu0 0.0
    %1037 = vmatprep.subr.mxu0 0.0
    %1038 = vmatpush2.msra.mxu0 0.0
    %1039 = vmatprep.subr.mxu0 0.0
    %1040 = vmatpush2.msra.mxu0 0.0
    %1041 = vmatprep.subr.mxu0 0.0
    %1042 = vmatpush2.msra.mxu0 0.0
    %1043 = vmatprep.subr.mxu0 0.0
    %1044 = vmatpush2.msra.mxu0 0.0
    %1045 = vmatprep.subr.mxu0 0.0
    %1046 = vmatpush2.msra.mxu0 0.0
    %1047 = vmatprep.subr.mxu0 0.0
    %1048 = vmatpush2.msra.mxu0 0.0
    %1049 = vmatprep.subr.mxu0 0.0
    %1050 = vmatpush2.msra.mxu0 0.0
    %1051 = vmatprep.subr.mxu0 0.0
    %1052 = vmatpush2.msra.mxu0 0.0
    %1053 = vmatprep.mubr.f32.mxu0 0.0
    %1054 = vmatmul.mubr.f32.gmra.mxu0 %v987
    %v1055 = vpop.f32.mrf.mxu0
    %v1056 = vadd.f32 0.0, %v1055
    %v1057 = vpop.f32.mrf.mxu0
    %1058 = vdwg.mxu0
    %v1059 = vld [vmem:[%s7] sm:$0xff]
    %v1060 = vld [vmem:[%s7 + $0x8] sm:$0xff]
    %v1061 = vld [vmem:[%s7 + $0x10] sm:$0xff]
    %v1062 = vld [vmem:[%s7 + $0x18] sm:$0xff]
    %v1063 = vld [vmem:[%s7 + $0x20] sm:$0xff]
    %v1064 = vld [vmem:[%s7 + $0x28] sm:$0xff]
    %v1065 = vld [vmem:[%s7 + $0x30] sm:$0xff]
    %v1066 = vld [vmem:[%s7 + $0x38] sm:$0xff]
    %v1067 = vld [vmem:[%s7 + $0x40] sm:$0xff]
    %v1068 = vld [vmem:[%s7 + $0x48] sm:$0xff]
    %v1069 = vld [vmem:[%s7 + $0x50] sm:$0xff]
    %v1070 = vld [vmem:[%s7 + $0x58] sm:$0xff]
    %v1071 = vld [vmem:[%s7 + $0x60] sm:$0xff]
    %v1072 = vld [vmem:[%s7 + $0x68] sm:$0xff]
    %v1073 = vld [vmem:[%s7 + $0x70] sm:$0xff]
    %v1074 = vld [vmem:[%s7 + $0x78] sm:$0xff]
    %v1075 = vlaneseq
    %v1076 = vshrl.u32 %v1075, 7
    %v1077 = vsub.s32 2, %v1076
    %v1078 = vrot.slane %v73, %v1077
    %1079 = vmatprep.subr.mxu0 0.0
    %1080 = vmatpush1.msra.mxu0 %v1074
    %1081 = vmatprep.subr.mxu0 0.0
    %1082 = vmatpush1.msra.mxu0 %v1073
    %1083 = vmatprep.subr.mxu0 0.0
    %1084 = vmatpush1.msra.mxu0 %v1072
    %1085 = vmatprep.subr.mxu0 0.0
    %1086 = vmatpush1.msra.mxu0 %v1071
    %1087 = vmatprep.subr.mxu0 0.0
    %1088 = vmatpush1.msra.mxu0 %v1070
    %1089 = vmatprep.subr.mxu0 0.0
    %1090 = vmatpush1.msra.mxu0 %v1069
    %1091 = vmatprep.subr.mxu0 0.0
    %1092 = vmatpush1.msra.mxu0 %v1068
    %1093 = vmatprep.subr.mxu0 0.0
    %1094 = vmatpush1.msra.mxu0 %v1067
    %1095 = vmatprep.subr.mxu0 0.0
    %1096 = vmatpush1.msra.mxu0 %v1066
    %1097 = vmatprep.subr.mxu0 0.0
    %1098 = vmatpush1.msra.mxu0 %v1065
    %1099 = vmatprep.subr.mxu0 0.0
    %1100 = vmatpush1.msra.mxu0 %v1064
    %1101 = vmatprep.subr.mxu0 0.0
    %1102 = vmatpush1.msra.mxu0 %v1063
    %1103 = vmatprep.subr.mxu0 0.0
    %1104 = vmatpush1.msra.mxu0 %v1062
    %1105 = vmatprep.subr.mxu0 0.0
    %1106 = vmatpush1.msra.mxu0 %v1061
    %1107 = vmatprep.subr.mxu0 0.0
    %1108 = vmatpush1.msra.mxu0 %v1060
    %1109 = vmatprep.subr.mxu0 0.0
    %1110 = vmatpush1.msra.mxu0 %v1059
    %1111 = vmatprep.subr.mxu0 0.0
    %1112 = vmatpush2.msra.mxu0 0.0
    %1113 = vmatprep.subr.mxu0 0.0
    %1114 = vmatpush2.msra.mxu0 0.0
    %1115 = vmatprep.subr.mxu0 0.0
    %1116 = vmatpush2.msra.mxu0 0.0
    %1117 = vmatprep.subr.mxu0 0.0
    %1118 = vmatpush2.msra.mxu0 0.0
    %1119 = vmatprep.subr.mxu0 0.0
    %1120 = vmatpush2.msra.mxu0 0.0
    %1121 = vmatprep.subr.mxu0 0.0
    %1122 = vmatpush2.msra.mxu0 0.0
    %1123 = vmatprep.subr.mxu0 0.0
    %1124 = vmatpush2.msra.mxu0 0.0
    %1125 = vmatprep.subr.mxu0 0.0
    %1126 = vmatpush2.msra.mxu0 0.0
    %1127 = vmatprep.subr.mxu0 0.0
    %1128 = vmatpush2.msra.mxu0 0.0
    %1129 = vmatprep.subr.mxu0 0.0
    %1130 = vmatpush2.msra.mxu0 0.0
    %1131 = vmatprep.subr.mxu0 0.0
    %1132 = vmatpush2.msra.mxu0 0.0
    %1133 = vmatprep.subr.mxu0 0.0
    %1134 = vmatpush2.msra.mxu0 0.0
    %1135 = vmatprep.subr.mxu0 0.0
    %1136 = vmatpush2.msra.mxu0 0.0
    %1137 = vmatprep.subr.mxu0 0.0
    %1138 = vmatpush2.msra.mxu0 0.0
    %1139 = vmatprep.subr.mxu0 0.0
    %1140 = vmatpush2.msra.mxu0 0.0
    %1141 = vmatprep.subr.mxu0 0.0
    %1142 = vmatpush2.msra.mxu0 0.0
    %1143 = vmatprep.mubr.f32.mxu0 0.0
    %1144 = vmatmul.mubr.f32.gmra.mxu0 %v983
    %v1145 = vpop.f32.mrf.mxu0
    %v1146 = vadd.f32 %v1078, %v1145
    %v1147 = vpop.f32.mrf.mxu0
    %1148 = vmatprep.mubr.f32.mxu0 0.0
    %1149 = vmatmul.mubr.f32.gmra.mxu0 %v1056
    %v1150 = vpop.f32.mrf.mxu0
    %v1151 = vadd.f32 %v1078, %v1150
    %v1152 = vpop.f32.mrf.mxu0
    %1153 = vdwg.mxu0
    %v1154 = vadd.f32 %v1146, %v519
    %v1155 = vadd.f32 %v1151, %v520
    %v1156 = vsel %vm97, %v1154, 0.0
    %1157 = vadd.xlane.f32.xlu0 %v1156
    %v1158 = vpop.xlane.xlu0 %1157
    %v1159 = vsel %vm97, %v1155, 0.0
    %1160 = vadd.xlane.f32.xlu0 %v1159
    %v1161 = vpop.xlane.xlu0 %1160
    %v1162 = vmul.f32 %v1158, %v104
    %v1163 = vmul.f32 %v1161, %v104
    %v1164 = vmul.f32 %v1154, %v1154
    %v1165 = vmul.f32 %v1155, %v1155
    %v1166 = vsel %vm97, %v1164, 0.0
    %1167 = vadd.xlane.f32.xlu0 %v1166
    %v1168 = vpop.xlane.xlu0 %1167
    %v1169 = vsel %vm97, %v1165, 0.0
    %1170 = vadd.xlane.f32.xlu0 %v1169
    %v1171 = vpop.xlane.xlu0 %1170
    %v1172 = vmul.f32 %v1168, %v104
    %v1173 = vmul.f32 %v1171, %v104
    %v1174 = vmul.f32 %v1162, %v1162
    %v1175 = vmul.f32 %v1163, %v1163
    %v1176 = vsub.f32 %v1172, %v1174
    %v1177 = vsub.f32 %v1173, %v1175
    %v1178 = vsub.f32 %v1154, %v1162
    %v1179 = vsub.f32 %v1155, %v1163
    %v1180 = vadd.f32 %v1176, 1e-05
    %v1181 = vadd.f32 %v1177, 1e-05
    %v1182 = vrsqrt.pop %v1180
    %v1183 = vrsqrt.pop %v1181
    %v1184 = vmul.f32 %v1178, %v1182
    %v1185 = vmul.f32 %v1179, %v1183
    %v1186 = vlaneseq
    %v1187 = vshrl.u32 %v1186, 7
    %v1188 = vsub.s32 3, %v1187
    %v1189 = vrot.slane %v73, %v1188
    %v1190 = vmul.f32 %v1184, %v1189
    %v1191 = vmul.f32 %v1185, %v1189
    %v1192 = vlaneseq
    %v1193 = vshrl.u32 %v1192, 7
    %v1194 = vsub.s32 4, %v1193
    %v1195 = vrot.slane %v73, %v1194
    %v1196 = vadd.f32 %v1190, %v1195
    %v1197 = vadd.f32 %v1191, %v1195
    %v1198 = vld [vmem:[%s8] sm:$0xff]
    %v1199 = vld [vmem:[%s8 + $0x8] sm:$0xff]
    %v1200 = vld [vmem:[%s8 + $0x10] sm:$0xff]
    %v1201 = vld [vmem:[%s8 + $0x18] sm:$0xff]
    %v1202 = vlaneseq
    %v1203 = vshrl.u32 %v1202, 7
    %v1204 = vsub.s32 5, %v1203
    %v1205 = vrot.slane %v73, %v1204
    %v1207 = vsel %vm97, %v1196, 0
    %v1210 = vsel %vm97, %v1197, 0
    %1212 = vmatprep.subr.mxu0 0.0
    %1213 = vmatpush1.msra.mxu0 0.0
    %1214 = vmatprep.subr.mxu0 0.0
    %1215 = vmatpush1.msra.mxu0 0.0
    %1216 = vmatprep.subr.mxu0 0.0
    %1217 = vmatpush1.msra.mxu0 0.0
    %1218 = vmatprep.subr.mxu0 0.0
    %1219 = vmatpush1.msra.mxu0 0.0
    %1220 = vmatprep.subr.mxu0 0.0
    %1221 = vmatpush1.msra.mxu0 0.0
    %1222 = vmatprep.subr.mxu0 0.0
    %1223 = vmatpush1.msra.mxu0 0.0
    %1224 = vmatprep.subr.mxu0 0.0
    %1225 = vmatpush1.msra.mxu0 0.0
    %1226 = vmatprep.subr.mxu0 0.0
    %1227 = vmatpush1.msra.mxu0 0.0
    %1228 = vmatprep.subr.mxu0 0.0
    %1229 = vmatpush1.msra.mxu0 0.0
    %1230 = vmatprep.subr.mxu0 0.0
    %1231 = vmatpush1.msra.mxu0 0.0
    %1232 = vmatprep.subr.mxu0 0.0
    %1233 = vmatpush1.msra.mxu0 0.0
    %1234 = vmatprep.subr.mxu0 0.0
    %1235 = vmatpush1.msra.mxu0 0.0
    %1236 = vmatprep.subr.mxu0 0.0
    %1237 = vmatpush1.msra.mxu0 %v1201
    %1238 = vmatprep.subr.mxu0 0.0
    %1239 = vmatpush1.msra.mxu0 %v1200
    %1240 = vmatprep.subr.mxu0 0.0
    %1241 = vmatpush1.msra.mxu0 %v1199
    %1242 = vmatprep.subr.mxu0 0.0
    %1243 = vmatpush1.msra.mxu0 %v1198
    %1244 = vmatprep.subr.mxu0 0.0
    %1245 = vmatpush2.msra.mxu0 0.0
    %1246 = vmatprep.subr.mxu0 0.0
    %1247 = vmatpush2.msra.mxu0 0.0
    %1248 = vmatprep.subr.mxu0 0.0
    %1249 = vmatpush2.msra.mxu0 0.0
    %1250 = vmatprep.subr.mxu0 0.0
    %1251 = vmatpush2.msra.mxu0 0.0
    %1252 = vmatprep.subr.mxu0 0.0
    %1253 = vmatpush2.msra.mxu0 0.0
    %1254 = vmatprep.subr.mxu0 0.0
    %1255 = vmatpush2.msra.mxu0 0.0
    %1256 = vmatprep.subr.mxu0 0.0
    %1257 = vmatpush2.msra.mxu0 0.0
    %1258 = vmatprep.subr.mxu0 0.0
    %1259 = vmatpush2.msra.mxu0 0.0
    %1260 = vmatprep.subr.mxu0 0.0
    %1261 = vmatpush2.msra.mxu0 0.0
    %1262 = vmatprep.subr.mxu0 0.0
    %1263 = vmatpush2.msra.mxu0 0.0
    %1264 = vmatprep.subr.mxu0 0.0
    %1265 = vmatpush2.msra.mxu0 0.0
    %1266 = vmatprep.subr.mxu0 0.0
    %1267 = vmatpush2.msra.mxu0 0.0
    %1268 = vmatprep.subr.mxu0 0.0
    %1269 = vmatpush2.msra.mxu0 0.0
    %1270 = vmatprep.subr.mxu0 0.0
    %1271 = vmatpush2.msra.mxu0 0.0
    %1272 = vmatprep.subr.mxu0 0.0
    %1273 = vmatpush2.msra.mxu0 0.0
    %1274 = vmatprep.subr.mxu0 0.0
    %1275 = vmatpush2.msra.mxu0 0.0
    %1276 = vmatprep.mubr.f32.mxu0 0.0
    %1277 = vmatmul.mubr.f32.gmra.mxu0 %v1207
    %v1278 = vpop.f32.mrf.mxu0
    %v1279 = vadd.f32 %v1205, %v1278
    %v1280 = vpop.f32.mrf.mxu0
    %1281 = vmatprep.mubr.f32.mxu0 0.0
    %1282 = vmatmul.mubr.f32.gmra.mxu0 %v1210
    %v1283 = vpop.f32.mrf.mxu0
    %v1284 = vadd.f32 %v1205, %v1283
    %v1285 = vpop.f32.mrf.mxu0
    %1286 = vdwg.mxu0
    %v1287 = vadd.f32 %v1279, %v1154
    %v1288 = vadd.f32 %v1284, %v1155
    %1289 = vst.msk [vmem:[#allocation8] sm:$0xff] %vm97, %v1287
    %1290 = vst.msk [vmem:[#allocation8 + $0x8] sm:$0xff] %vm97, %v1288
    // Predicated region
    $region50: #{tpu_custom_call.1} parent=1 // pred_check
      _
    $region51: #{tpu_custom_call.1} parent=1 // pred_check_branch
      %1292 = sbr.rel (0) target = $region53
    $region52: #{tpu_custom_call.1} parent=1 // pred_region
      %s1294 = ssub.s32 256, 256
      %1295 = vsyncadd [#allocation4], %s1294
      %s1296 = sshll.u32 [#allocation8], 4
      %s1297 = int_to_ptr.vmem [resolvable:$true] %s1296
      %1302 = dma.vmem_to_hbm [thread:$0]  %s1297, 256, %s9, [#allocation4], 128, 128, 8
    $region53: #{tpu_custom_call.1} parent=1 // pred_fallthru
      _
    // Predicated region
    $region54: #{tpu_custom_call.1} parent=1 // pred_check
      _
    $region55: #{tpu_custom_call.1} parent=1 // pred_check_branch
      %1304 = sbr.rel (0) target = $region57
    $region56: #{tpu_custom_call.1} parent=1 // pred_region
      %1305 = dma.done [#allocation4], 256
    $region57: #{tpu_custom_call.1} parent=1 // pred_fallthru
      _
    %1306 = vsyncpa [#allocation3], 1
    %1307 = vsyncpa [#allocation6], 1
    %1308 = vsyncpa [#allocation4], 1

</llo_original>
